<compile_context>
chip_gen: v7x
topology: tpu7x:2x2x1
jax: 0.10.0
libtpu: 0.0.40
codegen_flags: <defaults>
</compile_context>

<pallas_src>
import math

import jax
import jax.numpy as jnp
import numpy as np
from jax.experimental import pallas as pl
from jax.experimental.pallas import tpu as pltpu

HIDDEN = 32
NUM_HEADS = 2
HEAD_DIM = HIDDEN // NUM_HEADS               # 16
MLP_DIM = 64
SEQ = 8
BATCH = 2
LN_EPS = 1e-6                                # nn.LayerNorm(eps=1e-6)
RMS_EPS = float(jnp.finfo(jnp.float32).eps)  # torch RMSNorm(eps=None) default for f32


def _gelu_tanh(x):
    c = math.sqrt(2.0 / math.pi)
    return 0.5 * x * (1.0 + jnp.tanh(c * (x + 0.044715 * x * x * x)))


def _silu(x):
    return x * jax.nn.sigmoid(x)


# ----------------------------- Pallas kernel ----------------------------------
def _single_stream_kernel(x_ref, vec_ref, pe_ref, wproj_ref, wmod_ref, wout_ref,
                          b_ref, o_ref):
    H, NH, D, M = HIDDEN, NUM_HEADS, HEAD_DIM, MLP_DIM
    D2 = D // 2
    f32, bf16 = jnp.float32, jnp.bfloat16

    x = x_ref[...]                                   # (L, H)  this batch's rows
    vec = vec_ref[...]                               # (1, H)

    # ---- Modulation: one tiny (1,H)@(H,3H) matmul per batch, broadcast is free ----
    sv = _silu(vec)
    mod = jnp.dot(sv.astype(bf16), wmod_ref[...].astype(bf16),
                  preferred_element_type=f32) + b_ref[1:2, :3 * H]          # (1, 3H)
    shift, scale, gate = mod[:, :H], mod[:, H:2 * H], mod[:, 2 * H:]

    # ---- pre_norm (LayerNorm, no affine) + modulate (f32 statistics) ----
    mu = jnp.mean(x, axis=-1, keepdims=True)
    xc = x - mu
    var = jnp.mean(xc * xc, axis=-1, keepdims=True)
    x_mod = (1.0 + scale) * (xc * jax.lax.rsqrt(var + LN_EPS)) + shift       # (L, H)

    # ---- fused [q | k | v | mlp-hidden] projection: ONE (L,H)@(H,3H+M) matmul ----
    proj = jnp.dot(x_mod.astype(bf16), wproj_ref[...].astype(bf16),
                   preferred_element_type=f32) + b_ref[0:1, :]               # (L, 3H+M)
    q_all, k_all = proj[:, :H], proj[:, H:2 * H]     # de-interleaved head layout

    # ---- MLP branch: GELU -> Linear -> GELU ----
    h1 = _gelu_tanh(proj[:, 3 * H:])                                         # (L, M)
    mlp_out = jnp.dot(h1.astype(bf16), wout_ref[2 * H:, :].astype(bf16),
                      preferred_element_type=f32) + b_ref[2:3, :H]
    mlp_act = _gelu_tanh(mlp_out)                                            # (L, H)

    # ---- RoPE: pair swap == half swap per head in the de-interleaved layout ----
    pe = pe_ref[...]                                 # (L, 4H) [Aq | Bq | Ak | Bk]
    # TODO(synk): at real flux head_dim (128) replace this slice swap with a single
    # pltpu.roll(t, D // 2, axis=-1) per head (XLU slot, free under MXU work).
    def half_swap(t):
        return jnp.concatenate(
            [t[:, h * D + off: h * D + off + D2] for h in range(NH) for off in (D2, 0)],
            axis=-1)
    q_rot = pe[:, :H] * q_all + pe[:, H:2 * H] * half_swap(q_all)            # (L, H)
    k_rot = pe[:, 2 * H:3 * H] * k_all + pe[:, 3 * H:] * half_swap(k_all)

    # ---- linear2, split-accumulated (no concat): start with the MLP half ----
    out = jnp.dot(mlp_act.astype(bf16), wout_ref[H:2 * H, :].astype(bf16),
                  preferred_element_type=f32) + b_ref[3:4, :H]               # (L, H)

    inv_sqrt_d = 1.0 / math.sqrt(D)
    for h in range(NH):                              # tiny static unroll over heads
        c = h * D
        q_raw, k_raw = q_all[:, c:c + D], k_all[:, c:c + D]
        v = proj[:, 2 * H + c: 2 * H + c + D]
        # QK RMSNorm: per-row scalar, permutation-invariant, commutes with RoPE;
        # the RMSNorm weights are folded into the pe maps in the wrapper.
        inv_rq = jax.lax.rsqrt(jnp.mean(q_raw * q_raw, axis=-1, keepdims=True) + RMS_EPS)
        inv_rk = jax.lax.rsqrt(jnp.mean(k_raw * k_raw, axis=-1, keepdims=True) + RMS_EPS)
        qr = (q_rot[:, c:c + D] * inv_rq).astype(bf16)
        kr = (k_rot[:, c:c + D] * inv_rk).astype(bf16)
        s = jax.lax.dot_general(qr, kr, (((1,), (1,)), ((), ())),
                                preferred_element_type=f32) * inv_sqrt_d     # (L, L)
        s = s - jnp.max(s, axis=-1, keepdims=True)   # f32 softmax
        e = jnp.exp(s)
        p = e * pl.reciprocal(jnp.sum(e, axis=-1, keepdims=True), approx=True)
        head_out = jnp.dot(p.astype(bf16), v.astype(bf16),
                           preferred_element_type=f32)                       # (L, D)
        # accumulate this head's contribution of linear2 directly (no attn concat)
        out = out + jnp.dot(head_out.astype(bf16), wout_ref[c:c + D, :].astype(bf16),
                            preferred_element_type=f32)

    # TODO(synk): toy H=32 store is a masked sub-128-lane vst; real flux H=3072 is lane-dense.
    o_ref[...] = x + gate * out


# ----------------------------- wrapper (glue) ----------------------------------
def single_stream_block(x, vec, pe, params):
    B, L, H = x.shape
    NH, D, M = NUM_HEADS, HEAD_DIM, MLP_DIM
    D2 = D // 2
    WIDTH = 3 * H + M

    # De-interleave permutation ([evens | odds] within each head) for q/k columns so
    # the RoPE pair-swap becomes a half-swap (roll by D/2) in-kernel.
    perm_head = np.concatenate([np.arange(0, D, 2), np.arange(1, D, 2)])
    perm_qk = np.concatenate([h * D + perm_head for h in range(NH)])

    w1, b1 = params['w1'], params['b1']                      # (H, 3H), (1, 3H)
    w_proj = jnp.concatenate([w1[:, :H][:, perm_qk],         # q (de-interleaved)
                              w1[:, H:2 * H][:, perm_qk],    # k (de-interleaved)
                              w1[:, 2 * H:3 * H],            # v (original layout)
                              params['mlp_w0']], axis=1)     # (H, 3H+M)
    b_proj = jnp.concatenate([b1[:, :H][:, perm_qk],
                              b1[:, H:2 * H][:, perm_qk],
                              b1[:, 2 * H:3 * H],
                              params['mlp_b0']], axis=1)     # (1, 3H+M)

    # linear2 split + MLP-out weight stacked into one operand: rows [w2_attn | w2_mlp | mlp_w1]
    w_out = jnp.concatenate([params['w2'][:H], params['w2'][H:2 * H],
                             params['mlp_w1']], axis=0)      # (2H+M, H)

    def pad_w(v):
        return jnp.pad(v, ((0, 0), (0, WIDTH - v.shape[1])))
    b_pack = jnp.concatenate([b_proj, pad_w(params['mod_b']),
                              pad_w(params['mlp_b1']), pad_w(params['b2'])], axis=0)  # (4, 3H+M)

    # RoPE multiplier maps (de-interleaved) with QK-RMSNorm weights folded in, tiled
    # across heads and packed lane-dense: (B, L, 4H) with 4H = 128 lanes.
    f = pe[:, 0]                                             # (B, L, D/2, 2, 2)
    a_de = jnp.concatenate([f[..., 0, 0], f[..., 1, 1]], axis=-1)   # (B, L, D)
    b_de = jnp.concatenate([f[..., 0, 1], f[..., 1, 0]], axis=-1)
    qs = params['q_scale'][perm_head]
    ks = params['k_scale'][perm_head]
    swp = lambda s: jnp.concatenate([s[D2:], s[:D2]])
    maps = [a_de * qs, b_de * swp(qs), a_de * ks, b_de * swp(ks)]
    pe_pack = jnp.concatenate([jnp.tile(m, (1, 1, NH)) for m in maps], axis=-1)  # (B, L, 4H)

    vec3 = vec.reshape(B, 1, H)

    out = pl.pallas_call(
        _single_stream_kernel,
        out_shape=jax.ShapeDtypeStruct((B, L, H), jnp.float32),
        grid=(B,),
        in_specs=[
            pl.BlockSpec((None, L, H), lambda b: (b, 0, 0)),        # x (per batch)
            pl.BlockSpec((None, 1, H), lambda b: (b, 0, 0)),        # vec (per batch)
            pl.BlockSpec((None, L, 4 * H), lambda b: (b, 0, 0)),    # RoPE maps (per batch)
            pl.BlockSpec((H, 3 * H + M), lambda b: (0, 0)),         # fused in-proj weight
            pl.BlockSpec((H, 3 * H), lambda b: (0, 0)),             # modulation weight
            pl.BlockSpec((2 * H + M, H), lambda b: (0, 0)),         # fused out-proj weight
            pl.BlockSpec((4, 3 * H + M), lambda b: (0, 0)),         # packed biases
        ],
        out_specs=pl.BlockSpec((None, L, H), lambda b: (b, 0, 0)),
        compiler_params=pltpu.CompilerParams(dimension_semantics=("parallel",)),
    )(x, vec3, pe_pack, w_proj, params['mod_w'], w_out, b_pack)
    return out


# ----------------------------- params / inputs ---------------------------------
def init_params(key):
    H, D, M = HIDDEN, HEAD_DIM, MLP_DIM
    ks = jax.random.split(key, 10)

    def lin(kw, kb, din, dout, s=0.05):
        return (s * jax.random.normal(kw, (din, dout), jnp.float32),
                s * jax.random.normal(kb, (1, dout), jnp.float32))

    w1, b1 = lin(ks[0], ks[1], H, 3 * H)
    mw0, mb0 = lin(ks[2], ks[3], H, M)
    mw1, mb1 = lin(ks[4], ks[5], M, H)
    w2, b2 = lin(ks[6], ks[7], 2 * H, H)
    mod_w, mod_b = lin(ks[8], ks[9], H, 3 * H)
    return dict(w1=w1, b1=b1, mlp_w0=mw0, mlp_b0=mb0, mlp_w1=mw1, mlp_b1=mb1,
                w2=w2, b2=b2, mod_w=mod_w, mod_b=mod_b,
                q_scale=jnp.ones((D,), jnp.float32),   # torch RMSNorm init
                k_scale=jnp.ones((D,), jnp.float32))


def make_pe(B, L, D):
    pos = jnp.arange(L, dtype=jnp.float32)[:, None]
    dim = jnp.arange(D // 2, dtype=jnp.float32)[None, :]
    freqs = pos / (10000.0 ** (2.0 * dim / D))
    cos, sin = jnp.cos(freqs), jnp.sin(freqs)
    mat = jnp.stack([jnp.stack([cos, -sin], -1), jnp.stack([sin, cos], -1)], -2)  # (L, D/2, 2, 2)
    return jnp.broadcast_to(mat[None, None], (B, 1, L, D // 2, 2, 2))


# ----------------------------- pure-JAX reference ------------------------------
def reference(x, vec, pe, p):
    B, L, H = x.shape
    NH, D = NUM_HEADS, HEAD_DIM
    sv = _silu(vec)
    mod = sv @ p['mod_w'] + p['mod_b'][0]
    shift, scale, gate = mod[:, None, :H], mod[:, None, H:2 * H], mod[:, None, 2 * H:]
    mu = x.mean(-1, keepdims=True)
    var = ((x - mu) ** 2).mean(-1, keepdims=True)
    x_mod = (1.0 + scale) * ((x - mu) / jnp.sqrt(var + LN_EPS)) + shift
    qkv = (x_mod @ p['w1'] + p['b1'][0]).reshape(B, L, 3, NH, D).transpose(2, 0, 3, 1, 4)
    q, k, v = qkv[0], qkv[1], qkv[2]
    rms = lambda t, w: t / jnp.sqrt((t * t).mean(-1, keepdims=True) + RMS_EPS) * w
    q, k = rms(q, p['q_scale']), rms(k, p['k_scale'])

    def rope(t):
        t_ = t.reshape(*t.shape[:-1], -1, 1, 2)
        return (pe[..., 0] * t_[..., 0] + pe[..., 1] * t_[..., 1]).reshape(t.shape)

    q, k = rope(q), rope(k)
    s = jnp.einsum('bhld,bhmd->bhlm', q, k) / math.sqrt(D)
    attn = jnp.einsum('bhlm,bhmd->bhld', jax.nn.softmax(s, axis=-1), v)
    attn = attn.transpose(0, 2, 1, 3).reshape(B, L, H)
    h1 = _gelu_tanh(x_mod @ p['mlp_w0'] + p['mlp_b0'][0])
    mlp = h1 @ p['mlp_w1'] + p['mlp_b1'][0]
    out = jnp.concatenate([attn, _gelu_tanh(mlp)], axis=-1) @ p['w2'] + p['b2'][0]
    return x + gate * out


# ----------------------------- main ---------------------------------------------
if __name__ == "__main__":
    key = jax.random.PRNGKey(0)
    kx, kv, kp = jax.random.split(key, 3)
    x = jax.random.normal(kx, (BATCH, SEQ, HIDDEN), jnp.float32)
    vec = jax.random.normal(kv, (BATCH, HIDDEN), jnp.float32)
    pe = make_pe(BATCH, SEQ, HEAD_DIM)
    params = init_params(kp)

    out = jax.jit(single_stream_block)(x, vec, pe, params)
    out = jax.block_until_ready(out)

    ref = reference(x, vec, pe, params)
    err = float(jnp.max(jnp.abs(out - ref)))
    assert out.shape == (BATCH, SEQ, HIDDEN)
    assert np.isfinite(np.asarray(out)).all()
    assert err < 1e-2, f"max abs diff vs reference: {err}"
    print("KERNEL_OK")
</pallas_src>

<mosaic_0001>
module attributes {stable_mosaic.version = 11 : i64} {
  func.func @_single_stream_kernel(%arg0: i32, %arg1: memref<1x8x32xf32, #tpu.memory_space<vmem>>, %arg2: memref<1x1x32xf32, #tpu.memory_space<vmem>>, %arg3: memref<1x8x128xf32, #tpu.memory_space<vmem>>, %arg4: memref<32x160xf32, #tpu.memory_space<vmem>>, %arg5: memref<32x96xf32, #tpu.memory_space<vmem>>, %arg6: memref<128x32xf32, #tpu.memory_space<vmem>>, %arg7: memref<4x160xf32, #tpu.memory_space<vmem>>, %arg8: memref<1x8x32xf32, #tpu.memory_space<vmem>>) attributes {dimension_semantics = [#tpu.dimension_semantics<parallel>], iteration_bounds = array<i64: 2>, scalar_prefetch = 0 : i64, scratch_operands = 0 : i64, tpu.core_type = #tpu.core_type<tc>, window_params = [{transform_indices = @transform_0, window_bounds = array<i64: 1, 8, 32>}, {transform_indices = @transform_1, window_bounds = array<i64: 1, 1, 32>}, {transform_indices = @transform_2, window_bounds = array<i64: 1, 8, 128>}, {pipeline_mode = #tpu.pipeline_mode<synchronous>, transform_indices = @transform_3, window_bounds = array<i64: 32, 160>}, {pipeline_mode = #tpu.pipeline_mode<synchronous>, transform_indices = @transform_4, window_bounds = array<i64: 32, 96>}, {pipeline_mode = #tpu.pipeline_mode<synchronous>, transform_indices = @transform_5, window_bounds = array<i64: 128, 32>}, {pipeline_mode = #tpu.pipeline_mode<synchronous>, transform_indices = @transform_6, window_bounds = array<i64: 4, 160>}, {transform_indices = @transform_7, window_bounds = array<i64: 1, 8, 32>}]} {
    %c0 = arith.constant 0 : index
    %c0_0 = arith.constant 0 : index
    %c0_1 = arith.constant 0 : index
    %0 = vector.load %arg1[%c0, %c0_0, %c0_1] : memref<1x8x32xf32, #tpu.memory_space<vmem>>, vector<1x8x32xf32>
    %1 = vector.shape_cast %0 : vector<1x8x32xf32> to vector<8x32xf32>
    %c0_2 = arith.constant 0 : index
    %c0_3 = arith.constant 0 : index
    %c0_4 = arith.constant 0 : index
    %2 = vector.load %arg2[%c0_2, %c0_3, %c0_4] : memref<1x1x32xf32, #tpu.memory_space<vmem>>, vector<1x1x32xf32>
    %3 = vector.shape_cast %2 : vector<1x1x32xf32> to vector<1x32xf32>
    %4 = arith.negf %3 : vector<1x32xf32>
    %5 = math.exp %4 : vector<1x32xf32>
    %cst = arith.constant 1.000000e+00 : f32
    %6 = vector.broadcast %cst : f32 to vector<1x32xf32>
    %7 = arith.addf %6, %5 : vector<1x32xf32>
    %8 = arith.divf %6, %7 : vector<1x32xf32>
    %9 = arith.mulf %3, %8 : vector<1x32xf32>
    %10 = arith.truncf %9 : vector<1x32xf32> to vector<1x32xbf16>
    %c0_5 = arith.constant 0 : index
    %c0_6 = arith.constant 0 : index
    %11 = vector.load %arg5[%c0_5, %c0_6] : memref<32x96xf32, #tpu.memory_space<vmem>>, vector<32x96xf32>
    %12 = arith.truncf %11 : vector<32x96xf32> to vector<32x96xbf16>
    %cst_7 = arith.constant dense<0.000000e+00> : vector<1x96xf32>
    %13 = tpu.matmul %10, %12, %cst_7 {dimension_numbers = #tpu.dot_dimension_numbers<[1], [0], [0], [1], [0, 0, 1, 1], [], []>} : vector<1x32xbf16>, vector<32x96xbf16>, vector<1x96xf32> -> vector<1x96xf32>
    %c1 = arith.constant 1 : index
    %c0_8 = arith.constant 0 : index
    %14 = vector.load %arg7[%c1, %c0_8] : memref<4x160xf32, #tpu.memory_space<vmem>>, vector<1x96xf32>
    %15 = arith.addf %13, %14 : vector<1x96xf32>
    %16 = vector.extract_strided_slice %15 {offsets = [0, 0], sizes = [1, 32], strides = [1, 1]} : vector<1x96xf32> to vector<1x32xf32>
    %17 = vector.extract_strided_slice %15 {offsets = [0, 32], sizes = [1, 32], strides = [1, 1]} : vector<1x96xf32> to vector<1x32xf32>
    %18 = vector.extract_strided_slice %15 {offsets = [0, 64], sizes = [1, 32], strides = [1, 1]} : vector<1x96xf32> to vector<1x32xf32>
    %cst_9 = arith.constant dense<0.000000e+00> : vector<8xf32>
    %19 = vector.multi_reduction <add>, %1, %cst_9 [1] : vector<8x32xf32> to vector<8xf32>
    %20 = vector.shape_cast %19 : vector<8xf32> to vector<8x1xf32>
    %cst_10 = arith.constant 3.200000e+01 : f32
    %21 = vector.broadcast %cst_10 : f32 to vector<8x1xf32>
    %22 = arith.divf %20, %21 : vector<8x1xf32>
    %23 = vector.broadcast %22 : vector<8x1xf32> to vector<8x32xf32>
    %24 = arith.subf %1, %23 : vector<8x32xf32>
    %25 = arith.mulf %24, %24 : vector<8x32xf32>
    %cst_11 = arith.constant dense<0.000000e+00> : vector<8xf32>
    %26 = vector.multi_reduction <add>, %25, %cst_11 [1] : vector<8x32xf32> to vector<8xf32>
    %27 = vector.shape_cast %26 : vector<8xf32> to vector<8x1xf32>
    %cst_12 = arith.constant 3.200000e+01 : f32
    %28 = vector.broadcast %cst_12 : f32 to vector<8x1xf32>
    %29 = arith.divf %27, %28 : vector<8x1xf32>
    %cst_13 = arith.constant 1.000000e+00 : f32
    %30 = vector.broadcast %cst_13 : f32 to vector<1x32xf32>
    %31 = arith.addf %30, %17 : vector<1x32xf32>
    %cst_14 = arith.constant 9.99999997E-7 : f32
    %32 = vector.broadcast %cst_14 : f32 to vector<8x1xf32>
    %33 = arith.addf %29, %32 : vector<8x1xf32>
    %34 = math.rsqrt %33 : vector<8x1xf32>
    %35 = vector.broadcast %34 : vector<8x1xf32> to vector<8x32xf32>
    %36 = arith.mulf %24, %35 : vector<8x32xf32>
    %37 = vector.broadcast %31 : vector<1x32xf32> to vector<8x32xf32>
    %38 = arith.mulf %37, %36 : vector<8x32xf32>
    %39 = vector.broadcast %16 : vector<1x32xf32> to vector<8x32xf32>
    %40 = arith.addf %38, %39 : vector<8x32xf32>
    %41 = arith.truncf %40 : vector<8x32xf32> to vector<8x32xbf16>
    %c0_15 = arith.constant 0 : index
    %c0_16 = arith.constant 0 : index
    %42 = vector.load %arg4[%c0_15, %c0_16] : memref<32x160xf32, #tpu.memory_space<vmem>>, vector<32x160xf32>
    %43 = arith.truncf %42 : vector<32x160xf32> to vector<32x160xbf16>
    %cst_17 = arith.constant dense<0.000000e+00> : vector<8x160xf32>
    %44 = tpu.matmul %41, %43, %cst_17 {dimension_numbers = #tpu.dot_dimension_numbers<[1], [0], [0], [1], [0, 0, 1, 1], [], []>} : vector<8x32xbf16>, vector<32x160xbf16>, vector<8x160xf32> -> vector<8x160xf32>
    %c0_18 = arith.constant 0 : index
    %c0_19 = arith.constant 0 : index
    %45 = vector.load %arg7[%c0_18, %c0_19] : memref<4x160xf32, #tpu.memory_space<vmem>>, vector<1x160xf32>
    %46 = vector.broadcast %45 : vector<1x160xf32> to vector<8x160xf32>
    %47 = arith.addf %44, %46 : vector<8x160xf32>
    %48 = vector.extract_strided_slice %47 {offsets = [0, 0], sizes = [8, 32], strides = [1, 1]} : vector<8x160xf32> to vector<8x32xf32>
    %49 = vector.extract_strided_slice %47 {offsets = [0, 32], sizes = [8, 32], strides = [1, 1]} : vector<8x160xf32> to vector<8x32xf32>
    %50 = vector.extract_strided_slice %47 {offsets = [0, 96], sizes = [8, 64], strides = [1, 1]} : vector<8x160xf32> to vector<8x64xf32>
    %cst_20 = arith.constant 5.000000e-01 : f32
    %51 = vector.broadcast %cst_20 : f32 to vector<8x64xf32>
    %52 = arith.mulf %51, %50 : vector<8x64xf32>
    %cst_21 = arith.constant 4.471500e-02 : f32
    %53 = vector.broadcast %cst_21 : f32 to vector<8x64xf32>
    %54 = arith.mulf %53, %50 : vector<8x64xf32>
    %55 = arith.mulf %54, %50 : vector<8x64xf32>
    %56 = arith.mulf %55, %50 : vector<8x64xf32>
    %57 = arith.addf %50, %56 : vector<8x64xf32>
    %cst_22 = arith.constant 0.797884583 : f32
    %58 = vector.broadcast %cst_22 : f32 to vector<8x64xf32>
    %59 = arith.mulf %58, %57 : vector<8x64xf32>
    %60 = math.tanh %59 : vector<8x64xf32>
    %cst_23 = arith.constant 1.000000e+00 : f32
    %61 = vector.broadcast %cst_23 : f32 to vector<8x64xf32>
    %62 = arith.addf %61, %60 : vector<8x64xf32>
    %63 = arith.mulf %52, %62 : vector<8x64xf32>
    %64 = arith.truncf %63 : vector<8x64xf32> to vector<8x64xbf16>
    %c64 = arith.constant 64 : index
    %c0_24 = arith.constant 0 : index
    %65 = vector.load %arg6[%c64, %c0_24] : memref<128x32xf32, #tpu.memory_space<vmem>>, vector<64x32xf32>
    %66 = arith.truncf %65 : vector<64x32xf32> to vector<64x32xbf16>
    %cst_25 = arith.constant dense<0.000000e+00> : vector<8x32xf32>
    %67 = tpu.matmul %64, %66, %cst_25 {dimension_numbers = #tpu.dot_dimension_numbers<[1], [0], [0], [1], [0, 0, 1, 1], [], []>} : vector<8x64xbf16>, vector<64x32xbf16>, vector<8x32xf32> -> vector<8x32xf32>
    %c2 = arith.constant 2 : index
    %c0_26 = arith.constant 0 : index
    %68 = vector.load %arg7[%c2, %c0_26] : memref<4x160xf32, #tpu.memory_space<vmem>>, vector<1x32xf32>
    %69 = vector.broadcast %68 : vector<1x32xf32> to vector<8x32xf32>
    %70 = arith.addf %67, %69 : vector<8x32xf32>
    %cst_27 = arith.constant 5.000000e-01 : f32
    %71 = vector.broadcast %cst_27 : f32 to vector<8x32xf32>
    %72 = arith.mulf %71, %70 : vector<8x32xf32>
    %cst_28 = arith.constant 4.471500e-02 : f32
    %73 = vector.broadcast %cst_28 : f32 to vector<8x32xf32>
    %74 = arith.mulf %73, %70 : vector<8x32xf32>
    %75 = arith.mulf %74, %70 : vector<8x32xf32>
    %76 = arith.mulf %75, %70 : vector<8x32xf32>
    %77 = arith.addf %70, %76 : vector<8x32xf32>
    %cst_29 = arith.constant 0.797884583 : f32
    %78 = vector.broadcast %cst_29 : f32 to vector<8x32xf32>
    %79 = arith.mulf %78, %77 : vector<8x32xf32>
    %80 = math.tanh %79 : vector<8x32xf32>
    %cst_30 = arith.constant 1.000000e+00 : f32
    %81 = vector.broadcast %cst_30 : f32 to vector<8x32xf32>
    %82 = arith.addf %81, %80 : vector<8x32xf32>
    %83 = arith.mulf %72, %82 : vector<8x32xf32>
    %c0_31 = arith.constant 0 : index
    %c0_32 = arith.constant 0 : index
    %c0_33 = arith.constant 0 : index
    %84 = vector.load %arg3[%c0_31, %c0_32, %c0_33] : memref<1x8x128xf32, #tpu.memory_space<vmem>>, vector<1x8x128xf32>
    %85 = vector.shape_cast %84 : vector<1x8x128xf32> to vector<8x128xf32>
    %86 = vector.extract_strided_slice %85 {offsets = [0, 0], sizes = [8, 32], strides = [1, 1]} : vector<8x128xf32> to vector<8x32xf32>
    %87 = arith.mulf %86, %48 : vector<8x32xf32>
    %88 = vector.extract_strided_slice %85 {offsets = [0, 32], sizes = [8, 32], strides = [1, 1]} : vector<8x128xf32> to vector<8x32xf32>
    %89 = vector.extract_strided_slice %48 {offsets = [0, 8], sizes = [8, 8], strides = [1, 1]} : vector<8x32xf32> to vector<8x8xf32>
    %90 = vector.extract_strided_slice %48 {offsets = [0, 0], sizes = [8, 8], strides = [1, 1]} : vector<8x32xf32> to vector<8x8xf32>
    %91 = vector.extract_strided_slice %48 {offsets = [0, 24], sizes = [8, 8], strides = [1, 1]} : vector<8x32xf32> to vector<8x8xf32>
    %92 = vector.extract_strided_slice %48 {offsets = [0, 16], sizes = [8, 8], strides = [1, 1]} : vector<8x32xf32> to vector<8x8xf32>
    %93 = tpu.concatenate %89, %90, %91, %92 in 1 : vector<8x8xf32>, vector<8x8xf32>, vector<8x8xf32>, vector<8x8xf32> -> vector<8x32xf32>
    %94 = arith.mulf %88, %93 : vector<8x32xf32>
    %95 = arith.addf %87, %94 : vector<8x32xf32>
    %96 = vector.extract_strided_slice %85 {offsets = [0, 64], sizes = [8, 32], strides = [1, 1]} : vector<8x128xf32> to vector<8x32xf32>
    %97 = arith.mulf %96, %49 : vector<8x32xf32>
    %98 = vector.extract_strided_slice %85 {offsets = [0, 96], sizes = [8, 32], strides = [1, 1]} : vector<8x128xf32> to vector<8x32xf32>
    %99 = vector.extract_strided_slice %49 {offsets = [0, 8], sizes = [8, 8], strides = [1, 1]} : vector<8x32xf32> to vector<8x8xf32>
    %100 = vector.extract_strided_slice %49 {offsets = [0, 0], sizes = [8, 8], strides = [1, 1]} : vector<8x32xf32> to vector<8x8xf32>
    %101 = vector.extract_strided_slice %49 {offsets = [0, 24], sizes = [8, 8], strides = [1, 1]} : vector<8x32xf32> to vector<8x8xf32>
    %102 = vector.extract_strided_slice %49 {offsets = [0, 16], sizes = [8, 8], strides = [1, 1]} : vector<8x32xf32> to vector<8x8xf32>
    %103 = tpu.concatenate %99, %100, %101, %102 in 1 : vector<8x8xf32>, vector<8x8xf32>, vector<8x8xf32>, vector<8x8xf32> -> vector<8x32xf32>
    %104 = arith.mulf %98, %103 : vector<8x32xf32>
    %105 = arith.addf %97, %104 : vector<8x32xf32>
    %106 = arith.truncf %83 : vector<8x32xf32> to vector<8x32xbf16>
    %c32 = arith.constant 32 : index
    %c0_34 = arith.constant 0 : index
    %107 = vector.load %arg6[%c32, %c0_34] : memref<128x32xf32, #tpu.memory_space<vmem>>, vector<32x32xf32>
    %108 = arith.truncf %107 : vector<32x32xf32> to vector<32x32xbf16>
    %cst_35 = arith.constant dense<0.000000e+00> : vector<8x32xf32>
    %109 = tpu.matmul %106, %108, %cst_35 {dimension_numbers = #tpu.dot_dimension_numbers<[1], [0], [0], [1], [0, 0, 1, 1], [], []>} : vector<8x32xbf16>, vector<32x32xbf16>, vector<8x32xf32> -> vector<8x32xf32>
    %c3 = arith.constant 3 : index
    %c0_36 = arith.constant 0 : index
    %110 = vector.load %arg7[%c3, %c0_36] : memref<4x160xf32, #tpu.memory_space<vmem>>, vector<1x32xf32>
    %111 = vector.broadcast %110 : vector<1x32xf32> to vector<8x32xf32>
    %112 = arith.addf %109, %111 : vector<8x32xf32>
    %113 = vector.extract_strided_slice %48 {offsets = [0, 0], sizes = [8, 16], strides = [1, 1]} : vector<8x32xf32> to vector<8x16xf32>
    %114 = vector.extract_strided_slice %49 {offsets = [0, 0], sizes = [8, 16], strides = [1, 1]} : vector<8x32xf32> to vector<8x16xf32>
    %115 = vector.extract_strided_slice %47 {offsets = [0, 64], sizes = [8, 16], strides = [1, 1]} : vector<8x160xf32> to vector<8x16xf32>
    %116 = arith.mulf %113, %113 : vector<8x16xf32>
    %cst_37 = arith.constant dense<0.000000e+00> : vector<8xf32>
    %117 = vector.multi_reduction <add>, %116, %cst_37 [1] : vector<8x16xf32> to vector<8xf32>
    %118 = vector.shape_cast %117 : vector<8xf32> to vector<8x1xf32>
    %cst_38 = arith.constant 1.600000e+01 : f32
    %119 = vector.broadcast %cst_38 : f32 to vector<8x1xf32>
    %120 = arith.divf %118, %119 : vector<8x1xf32>
    %cst_39 = arith.constant 1.1920929E-7 : f32
    %121 = vector.broadcast %cst_39 : f32 to vector<8x1xf32>
    %122 = arith.addf %120, %121 : vector<8x1xf32>
    %123 = math.rsqrt %122 : vector<8x1xf32>
    %124 = arith.mulf %114, %114 : vector<8x16xf32>
    %cst_40 = arith.constant dense<0.000000e+00> : vector<8xf32>
    %125 = vector.multi_reduction <add>, %124, %cst_40 [1] : vector<8x16xf32> to vector<8xf32>
    %126 = vector.shape_cast %125 : vector<8xf32> to vector<8x1xf32>
    %cst_41 = arith.constant 1.600000e+01 : f32
    %127 = vector.broadcast %cst_41 : f32 to vector<8x1xf32>
    %128 = arith.divf %126, %127 : vector<8x1xf32>
    %cst_42 = arith.constant 1.1920929E-7 : f32
    %129 = vector.broadcast %cst_42 : f32 to vector<8x1xf32>
    %130 = arith.addf %128, %129 : vector<8x1xf32>
    %131 = math.rsqrt %130 : vector<8x1xf32>
    %132 = vector.extract_strided_slice %95 {offsets = [0, 0], sizes = [8, 16], strides = [1, 1]} : vector<8x32xf32> to vector<8x16xf32>
    %133 = vector.broadcast %123 : vector<8x1xf32> to vector<8x16xf32>
    %134 = arith.mulf %132, %133 : vector<8x16xf32>
    %135 = arith.truncf %134 : vector<8x16xf32> to vector<8x16xbf16>
    %136 = vector.extract_strided_slice %105 {offsets = [0, 0], sizes = [8, 16], strides = [1, 1]} : vector<8x32xf32> to vector<8x16xf32>
    %137 = vector.broadcast %131 : vector<8x1xf32> to vector<8x16xf32>
    %138 = arith.mulf %136, %137 : vector<8x16xf32>
    %139 = arith.truncf %138 : vector<8x16xf32> to vector<8x16xbf16>
    %cst_43 = arith.constant dense<0.000000e+00> : vector<8x8xf32>
    %140 = tpu.matmul %135, %139, %cst_43 {dimension_numbers = #tpu.dot_dimension_numbers<[1], [1], [0], [0], [0, 0, 1, 0], [], []>} : vector<8x16xbf16>, vector<8x16xbf16>, vector<8x8xf32> -> vector<8x8xf32>
    %cst_44 = arith.constant 2.500000e-01 : f32
    %141 = vector.broadcast %cst_44 : f32 to vector<8x8xf32>
    %142 = arith.mulf %140, %141 : vector<8x8xf32>
    %cst_45 = arith.constant dense<0xFF800000> : vector<8xf32>
    %143 = vector.multi_reduction <maximumf>, %142, %cst_45 [1] : vector<8x8xf32> to vector<8xf32>
    %144 = vector.shape_cast %143 : vector<8xf32> to vector<8x1xf32>
    %145 = vector.broadcast %144 : vector<8x1xf32> to vector<8x8xf32>
    %146 = arith.subf %142, %145 : vector<8x8xf32>
    %147 = math.exp %146 : vector<8x8xf32>
    %cst_46 = arith.constant dense<0.000000e+00> : vector<8xf32>
    %148 = vector.multi_reduction <add>, %147, %cst_46 [1] : vector<8x8xf32> to vector<8xf32>
    %149 = vector.shape_cast %148 : vector<8xf32> to vector<8x1xf32>
    %150 = tpu.reciprocal %149 {approx = true} : vector<8x1xf32> -> vector<8x1xf32>
    %151 = vector.broadcast %150 : vector<8x1xf32> to vector<8x8xf32>
    %152 = arith.mulf %147, %151 : vector<8x8xf32>
    %153 = arith.truncf %152 : vector<8x8xf32> to vector<8x8xbf16>
    %154 = arith.truncf %115 : vector<8x16xf32> to vector<8x16xbf16>
    %cst_47 = arith.constant dense<0.000000e+00> : vector<8x16xf32>
    %155 = tpu.matmul %153, %154, %cst_47 {dimension_numbers = #tpu.dot_dimension_numbers<[1], [0], [0], [1], [0, 0, 1, 1], [], []>} : vector<8x8xbf16>, vector<8x16xbf16>, vector<8x16xf32> -> vector<8x16xf32>
    %156 = arith.truncf %155 : vector<8x16xf32> to vector<8x16xbf16>
    %c0_48 = arith.constant 0 : index
    %c0_49 = arith.constant 0 : index
    %157 = vector.load %arg6[%c0_48, %c0_49] : memref<128x32xf32, #tpu.memory_space<vmem>>, vector<16x32xf32>
    %158 = arith.truncf %157 : vector<16x32xf32> to vector<16x32xbf16>
    %cst_50 = arith.constant dense<0.000000e+00> : vector<8x32xf32>
    %159 = tpu.matmul %156, %158, %cst_50 {dimension_numbers = #tpu.dot_dimension_numbers<[1], [0], [0], [1], [0, 0, 1, 1], [], []>} : vector<8x16xbf16>, vector<16x32xbf16>, vector<8x32xf32> -> vector<8x32xf32>
    %160 = arith.addf %112, %159 : vector<8x32xf32>
    %161 = vector.extract_strided_slice %48 {offsets = [0, 16], sizes = [8, 16], strides = [1, 1]} : vector<8x32xf32> to vector<8x16xf32>
    %162 = vector.extract_strided_slice %49 {offsets = [0, 16], sizes = [8, 16], strides = [1, 1]} : vector<8x32xf32> to vector<8x16xf32>
    %163 = vector.extract_strided_slice %47 {offsets = [0, 80], sizes = [8, 16], strides = [1, 1]} : vector<8x160xf32> to vector<8x16xf32>
    %164 = arith.mulf %161, %161 : vector<8x16xf32>
    %cst_51 = arith.constant dense<0.000000e+00> : vector<8xf32>
    %165 = vector.multi_reduction <add>, %164, %cst_51 [1] : vector<8x16xf32> to vector<8xf32>
    %166 = vector.shape_cast %165 : vector<8xf32> to vector<8x1xf32>
    %cst_52 = arith.constant 1.600000e+01 : f32
    %167 = vector.broadcast %cst_52 : f32 to vector<8x1xf32>
    %168 = arith.divf %166, %167 : vector<8x1xf32>
    %cst_53 = arith.constant 1.1920929E-7 : f32
    %169 = vector.broadcast %cst_53 : f32 to vector<8x1xf32>
    %170 = arith.addf %168, %169 : vector<8x1xf32>
    %171 = math.rsqrt %170 : vector<8x1xf32>
    %172 = arith.mulf %162, %162 : vector<8x16xf32>
    %cst_54 = arith.constant dense<0.000000e+00> : vector<8xf32>
    %173 = vector.multi_reduction <add>, %172, %cst_54 [1] : vector<8x16xf32> to vector<8xf32>
    %174 = vector.shape_cast %173 : vector<8xf32> to vector<8x1xf32>
    %cst_55 = arith.constant 1.600000e+01 : f32
    %175 = vector.broadcast %cst_55 : f32 to vector<8x1xf32>
    %176 = arith.divf %174, %175 : vector<8x1xf32>
    %cst_56 = arith.constant 1.1920929E-7 : f32
    %177 = vector.broadcast %cst_56 : f32 to vector<8x1xf32>
    %178 = arith.addf %176, %177 : vector<8x1xf32>
    %179 = math.rsqrt %178 : vector<8x1xf32>
    %180 = vector.extract_strided_slice %95 {offsets = [0, 16], sizes = [8, 16], strides = [1, 1]} : vector<8x32xf32> to vector<8x16xf32>
    %181 = vector.broadcast %171 : vector<8x1xf32> to vector<8x16xf32>
    %182 = arith.mulf %180, %181 : vector<8x16xf32>
    %183 = arith.truncf %182 : vector<8x16xf32> to vector<8x16xbf16>
    %184 = vector.extract_strided_slice %105 {offsets = [0, 16], sizes = [8, 16], strides = [1, 1]} : vector<8x32xf32> to vector<8x16xf32>
    %185 = vector.broadcast %179 : vector<8x1xf32> to vector<8x16xf32>
    %186 = arith.mulf %184, %185 : vector<8x16xf32>
    %187 = arith.truncf %186 : vector<8x16xf32> to vector<8x16xbf16>
    %cst_57 = arith.constant dense<0.000000e+00> : vector<8x8xf32>
    %188 = tpu.matmul %183, %187, %cst_57 {dimension_numbers = #tpu.dot_dimension_numbers<[1], [1], [0], [0], [0, 0, 1, 0], [], []>} : vector<8x16xbf16>, vector<8x16xbf16>, vector<8x8xf32> -> vector<8x8xf32>
    %cst_58 = arith.constant 2.500000e-01 : f32
    %189 = vector.broadcast %cst_58 : f32 to vector<8x8xf32>
    %190 = arith.mulf %188, %189 : vector<8x8xf32>
    %cst_59 = arith.constant dense<0xFF800000> : vector<8xf32>
    %191 = vector.multi_reduction <maximumf>, %190, %cst_59 [1] : vector<8x8xf32> to vector<8xf32>
    %192 = vector.shape_cast %191 : vector<8xf32> to vector<8x1xf32>
    %193 = vector.broadcast %192 : vector<8x1xf32> to vector<8x8xf32>
    %194 = arith.subf %190, %193 : vector<8x8xf32>
    %195 = math.exp %194 : vector<8x8xf32>
    %cst_60 = arith.constant dense<0.000000e+00> : vector<8xf32>
    %196 = vector.multi_reduction <add>, %195, %cst_60 [1] : vector<8x8xf32> to vector<8xf32>
    %197 = vector.shape_cast %196 : vector<8xf32> to vector<8x1xf32>
    %198 = tpu.reciprocal %197 {approx = true} : vector<8x1xf32> -> vector<8x1xf32>
    %199 = vector.broadcast %198 : vector<8x1xf32> to vector<8x8xf32>
    %200 = arith.mulf %195, %199 : vector<8x8xf32>
    %201 = arith.truncf %200 : vector<8x8xf32> to vector<8x8xbf16>
    %202 = arith.truncf %163 : vector<8x16xf32> to vector<8x16xbf16>
    %cst_61 = arith.constant dense<0.000000e+00> : vector<8x16xf32>
    %203 = tpu.matmul %201, %202, %cst_61 {dimension_numbers = #tpu.dot_dimension_numbers<[1], [0], [0], [1], [0, 0, 1, 1], [], []>} : vector<8x8xbf16>, vector<8x16xbf16>, vector<8x16xf32> -> vector<8x16xf32>
    %204 = arith.truncf %203 : vector<8x16xf32> to vector<8x16xbf16>
    %c16 = arith.constant 16 : index
    %c0_62 = arith.constant 0 : index
    %205 = vector.load %arg6[%c16, %c0_62] : memref<128x32xf32, #tpu.memory_space<vmem>>, vector<16x32xf32>
    %206 = arith.truncf %205 : vector<16x32xf32> to vector<16x32xbf16>
    %cst_63 = arith.constant dense<0.000000e+00> : vector<8x32xf32>
    %207 = tpu.matmul %204, %206, %cst_63 {dimension_numbers = #tpu.dot_dimension_numbers<[1], [0], [0], [1], [0, 0, 1, 1], [], []>} : vector<8x16xbf16>, vector<16x32xbf16>, vector<8x32xf32> -> vector<8x32xf32>
    %208 = arith.addf %160, %207 : vector<8x32xf32>
    %209 = vector.broadcast %18 : vector<1x32xf32> to vector<8x32xf32>
    %210 = arith.mulf %209, %208 : vector<8x32xf32>
    %211 = arith.addf %1, %210 : vector<8x32xf32>
    %c0_64 = arith.constant 0 : index
    %c0_65 = arith.constant 0 : index
    %c0_66 = arith.constant 0 : index
    %212 = vector.load %arg8[%c0_64, %c0_65, %c0_66] : memref<1x8x32xf32, #tpu.memory_space<vmem>>, vector<1x8x32xf32>
    %213 = vector.shape_cast %212 : vector<1x8x32xf32> to vector<8x32xf32>
    %214 = vector.shape_cast %211 : vector<8x32xf32> to vector<1x8x32xf32>
    tpu.vector_store %arg8[%c0_64, %c0_65, %c0_66], %214 {strides = array<i32>} : memref<1x8x32xf32, #tpu.memory_space<vmem>>, vector<1x8x32xf32>,
    return
  }
  func.func @transform_0(%arg0: i32) -> (i32, i32, i32) {
    %c0_i32 = arith.constant 0 : i32
    %c0_i32_0 = arith.constant 0 : i32
    %c0_i32_1 = arith.constant 0 : i32
    return %arg0, %c0_i32, %c0_i32_0 : i32, i32, i32
  }
  func.func @transform_1(%arg0: i32) -> (i32, i32, i32) {
    %c0_i32 = arith.constant 0 : i32
    %c0_i32_0 = arith.constant 0 : i32
    %c0_i32_1 = arith.constant 0 : i32
    return %arg0, %c0_i32, %c0_i32_0 : i32, i32, i32
  }
  func.func @transform_2(%arg0: i32) -> (i32, i32, i32) {
    %c0_i32 = arith.constant 0 : i32
    %c0_i32_0 = arith.constant 0 : i32
    %c0_i32_1 = arith.constant 0 : i32
    return %arg0, %c0_i32, %c0_i32_0 : i32, i32, i32
  }
  func.func @transform_3(%arg0: i32) -> (i32, i32) {
    %c0_i32 = arith.constant 0 : i32
    %c0_i32_0 = arith.constant 0 : i32
    %c0_i32_1 = arith.constant 0 : i32
    return %c0_i32, %c0_i32_0 : i32, i32
  }
  func.func @transform_4(%arg0: i32) -> (i32, i32) {
    %c0_i32 = arith.constant 0 : i32
    %c0_i32_0 = arith.constant 0 : i32
    %c0_i32_1 = arith.constant 0 : i32
    return %c0_i32, %c0_i32_0 : i32, i32
  }
  func.func @transform_5(%arg0: i32) -> (i32, i32) {
    %c0_i32 = arith.constant 0 : i32
    %c0_i32_0 = arith.constant 0 : i32
    %c0_i32_1 = arith.constant 0 : i32
    return %c0_i32, %c0_i32_0 : i32, i32
  }
  func.func @transform_6(%arg0: i32) -> (i32, i32) {
    %c0_i32 = arith.constant 0 : i32
    %c0_i32_0 = arith.constant 0 : i32
    %c0_i32_1 = arith.constant 0 : i32
    return %c0_i32, %c0_i32_0 : i32, i32
  }
  func.func @transform_7(%arg0: i32) -> (i32, i32, i32) {
    %c0_i32 = arith.constant 0 : i32
    %c0_i32_0 = arith.constant 0 : i32
    %c0_i32_1 = arith.constant 0 : i32
    return %arg0, %c0_i32, %c0_i32_0 : i32, i32, i32
  }
}

</mosaic_0001>

<llo_original>
// kernel: tile.24
$region0: #{tile.24}
  %s0 = inlined_call_operand.vmem [shape: f32[2,8,2,16], index: 0, kind: input, shape index: {}]
  %s1 = inlined_call_operand.vmem [shape: f32[2,8,32], index: 1, kind: output, shape index: {}]
  $region1: #{tile.24} parent=0
    #allocation0 [shape = 'u8[65536]{0}', space=vmem, size = 0x10000, scoped, tag = 'scoped mem for input reshape']
    %s3 = sshllo.u32 0, 2
    %s4 = smul.addr 2, 15
    %s5 = scalar_lea.vmem %s0, %s4
    %v6 = vld [vmem:[%s5] sm:%s3]
    %s7 = scalar_lea.vmem [#allocation0], 120
    %8 = vst [vmem:[%s7] sm:%s3] %v6
    %s9 = smul.addr 2, 14
    %s10 = scalar_lea.vmem %s0, %s9
    %v11 = vld [vmem:[%s10] sm:%s3]
    %s12 = scalar_lea.vmem [#allocation0], 112
    %13 = vst [vmem:[%s12] sm:%s3] %v11
    %s14 = smul.addr 2, 13
    %s15 = scalar_lea.vmem %s0, %s14
    %v16 = vld [vmem:[%s15] sm:%s3]
    %s17 = scalar_lea.vmem [#allocation0], 104
    %18 = vst [vmem:[%s17] sm:%s3] %v16
    %s19 = smul.addr 2, 12
    %s20 = scalar_lea.vmem %s0, %s19
    %v21 = vld [vmem:[%s20] sm:%s3]
    %s22 = scalar_lea.vmem [#allocation0], 96
    %23 = vst [vmem:[%s22] sm:%s3] %v21
    %s24 = smul.addr 2, 11
    %s25 = scalar_lea.vmem %s0, %s24
    %v26 = vld [vmem:[%s25] sm:%s3]
    %s27 = scalar_lea.vmem [#allocation0], 88
    %28 = vst [vmem:[%s27] sm:%s3] %v26
    %s29 = smul.addr 2, 10
    %s30 = scalar_lea.vmem %s0, %s29
    %v31 = vld [vmem:[%s30] sm:%s3]
    %s32 = scalar_lea.vmem [#allocation0], 80
    %33 = vst [vmem:[%s32] sm:%s3] %v31
    %s34 = smul.addr 2, 9
    %s35 = scalar_lea.vmem %s0, %s34
    %v36 = vld [vmem:[%s35] sm:%s3]
    %s37 = scalar_lea.vmem [#allocation0], 72
    %38 = vst [vmem:[%s37] sm:%s3] %v36
    %s39 = smul.addr 2, 8
    %s40 = scalar_lea.vmem %s0, %s39
    %v41 = vld [vmem:[%s40] sm:%s3]
    %s42 = scalar_lea.vmem [#allocation0], 64
    %43 = vst [vmem:[%s42] sm:%s3] %v41
    %s44 = smul.addr 2, 7
    %s45 = scalar_lea.vmem %s0, %s44
    %v46 = vld [vmem:[%s45] sm:%s3]
    %s47 = scalar_lea.vmem [#allocation0], 56
    %48 = vst [vmem:[%s47] sm:%s3] %v46
    %s49 = smul.addr 2, 6
    %s50 = scalar_lea.vmem %s0, %s49
    %v51 = vld [vmem:[%s50] sm:%s3]
    %s52 = scalar_lea.vmem [#allocation0], 48
    %53 = vst [vmem:[%s52] sm:%s3] %v51
    %s54 = smul.addr 2, 5
    %s55 = scalar_lea.vmem %s0, %s54
    %v56 = vld [vmem:[%s55] sm:%s3]
    %s57 = scalar_lea.vmem [#allocation0], 40
    %58 = vst [vmem:[%s57] sm:%s3] %v56
    %s59 = smul.addr 2, 4
    %s60 = scalar_lea.vmem %s0, %s59
    %v61 = vld [vmem:[%s60] sm:%s3]
    %s62 = scalar_lea.vmem [#allocation0], 32
    %63 = vst [vmem:[%s62] sm:%s3] %v61
    %s64 = smul.addr 2, 3
    %s65 = scalar_lea.vmem %s0, %s64
    %v66 = vld [vmem:[%s65] sm:%s3]
    %s67 = scalar_lea.vmem [#allocation0], 24
    %68 = vst [vmem:[%s67] sm:%s3] %v66
    %s69 = smul.addr 2, 2
    %s70 = scalar_lea.vmem %s0, %s69
    %v71 = vld [vmem:[%s70] sm:%s3]
    %s72 = scalar_lea.vmem [#allocation0], 16
    %73 = vst [vmem:[%s72] sm:%s3] %v71
    %s74 = scalar_lea.vmem %s0, 2
    %v75 = vld [vmem:[%s74] sm:%s3]
    %s76 = scalar_lea.vmem [#allocation0], 8
    %77 = vst [vmem:[%s76] sm:%s3] %v75
    %v78 = vld [vmem:[%s0] sm:%s3]
    %79 = vst [vmem:[#allocation0] sm:%s3] %v78
    %v80 = vld [vmem:[#allocation0] ss:$8 sm:$0xf]
    %v81 = vld [vmem:[#allocation0] ss:$8 sm:$0xf0]
    %vm82 = vcmask 1047556
    %v83 = vsel %vm82, %v81, %v80
    %vm84 = vcmask 130048
    %85 = vst.msk [vmem:[%s1] sm:$0xff] %vm84, %v83
    %s86 = scalar_lea.vmem [#allocation0], 64
    %v87 = vld [vmem:[%s86] ss:$8 sm:$0xf]
    %s88 = scalar_lea.vmem [#allocation0], 64
    %v89 = vld [vmem:[%s88] ss:$8 sm:$0xf0]
    %vm90 = vcmask 1047556
    %v91 = vsel %vm90, %v89, %v87
    %vm92 = vcmask 130048
    %s93 = scalar_lea.vmem %s1, 8
    %94 = vst.msk [vmem:[%s93] sm:$0xff] %vm92, %v91
    %s95 = scalar_lea.vmem [#allocation0], 1
    %v96 = vld [vmem:[%s95] ss:$8 sm:$0xf]
    %s97 = scalar_lea.vmem [#allocation0], 1
    %v98 = vld [vmem:[%s97] ss:$8 sm:$0xf0]
    %vm99 = vcmask 1047556
    %v100 = vsel %vm99, %v98, %v96
    %101 = vrot.lane.b32.xlu0 %v100, 16
    %v102 = vpop.permute.xlu0 %101
    %vm103 = vcmask 261248
    %104 = vst.msk [vmem:[%s1] sm:$0xff] %vm103, %v102
    %s105 = scalar_lea.vmem [#allocation0], 65
    %v106 = vld [vmem:[%s105] ss:$8 sm:$0xf]
    %s107 = scalar_lea.vmem [#allocation0], 65
    %v108 = vld [vmem:[%s107] ss:$8 sm:$0xf0]
    %vm109 = vcmask 1047556
    %v110 = vsel %vm109, %v108, %v106
    %111 = vrot.lane.b32.xlu0 %v110, 16
    %v112 = vpop.permute.xlu0 %111
    %vm113 = vcmask 261248
    %s114 = scalar_lea.vmem %s1, 8
    %115 = vst.msk [vmem:[%s114] sm:$0xff] %vm113, %v112

// kernel: single_stream_block.1
$region0: #{single_stream_block.1}
  #allocation0 [shape = 'u32[]', space=smem, size = 0x4, offset = 0x4, fixed_abs, tag = 'smem constant byte address 0x4 - core index']
  #allocation1 [shape = 'u32[144,128]{1,0:T(1,128)}', space=vmem, size = 0x12000, scoped, tag = 'internal scratch']
  %s0 = inlined_call_operand.vmem [shape: f32[2,8,32], index: 0, kind: input, shape index: {}]
  %s1 = inlined_call_operand.vmem [shape: f32[2,1,32], index: 1, kind: input, shape index: {}]
  %s2 = inlined_call_operand.vmem [shape: f32[2,8,128], index: 2, kind: input, shape index: {}]
  %s3 = inlined_call_operand.vmem [shape: f32[32,160], index: 3, kind: input, shape index: {}]
  %s4 = inlined_call_operand.vmem [shape: f32[32,96], index: 4, kind: input, shape index: {}]
  %s5 = inlined_call_operand.vmem [shape: f32[128,32], index: 5, kind: input, shape index: {}]
  %s6 = inlined_call_operand.vmem [shape: f32[4,160], index: 6, kind: input, shape index: {}]
  %s7 = inlined_call_operand.hbm [shape: f32[2,8,32], index: 7, kind: output, shape index: {}]
  %s8 = sld [smem:[#allocation0]]
  $region61: #{single_stream_block.1} parent=0
    _
  %s10 = ssub.s32 1, %s8
  %s11 = scalar_select 0, %s10, %s8
  $region1: #{single_stream_block.1} parent=0
    #allocation2 [shape = 'u8[8192]{0}', space=vmem, size = 0x2000, scoped, tag = 'output window, operand 0']
    #allocation3 [shape = 's32[2]{0}', space=sflag, size = 0x8, scoped, tag = 'scoped memory for single_stream_block.1']
    %12 = vsyncpa [#allocation3], 0
    %s13 = scalar_lea.sflag [#allocation3], 1
    %14 = vsyncpa %s13, 0
    loop: start=0, step=1, limit=4
    $region2: #{single_stream_block.1} parent=1 // loop_pre_header
      _
    $region3: #{single_stream_block.1} parent=1 // loop_header
      %s16 = sphi 0, %s20
      %p17 = scmp.ge.s32.totalorder %s16, 4
      %s26 = sphi 0, %s28
      %s29 = sphi 0, %s26
      %s30 = sphi 0, %s29
      %s46 = sphi 0, %s30
      %s52 = sphi 0, %s54
      %s55 = sphi 0, %s52
      %s56 = sphi 0, %s55
      %s72 = sphi 0, %s56
      %s78 = sphi 0, %s80
      %s81 = sphi 0, %s78
      %s82 = sphi 0, %s81
      %s98 = sphi 0, %s82
      %s102 = sphi 0, %s102
      %s104 = sphi 0, %s102
      %s105 = sphi 0, %s104
      %s119 = sphi 0, %s105
      %s123 = sphi 0, %s123
      %s125 = sphi 0, %s123
      %s126 = sphi 0, %s125
      %s140 = sphi 0, %s126
      %s144 = sphi 0, %s144
      %s146 = sphi 0, %s144
      %s147 = sphi 0, %s146
      %s161 = sphi 0, %s147
      %s165 = sphi 0, %s165
      %s167 = sphi 0, %s165
      %s168 = sphi 0, %s167
      %s182 = sphi 0, %s168
      %s188 = sphi 0, %s190
      %s191 = sphi 0, %s188
      %s192 = sphi 0, %s191
      %s208 = sphi 0, %s192
    $region4: #{single_stream_block.1} parent=1 // loop_header_branch
      %19 = sbr.rel (%p17) target = $region8
    $region5: #{single_stream_block.1} parent=1 // loop_body
      %s21 = ssub.s32 %s16, 1
      %s22 = ssub.s32 %s16, 2
      %s23 = sadd.s32 %s16, 1
      %s24 = ssub.s32 %s16, %s23
      %p25 = scmp.eq.s32.totalorder %s24, 0
      %s27 = sadd.s32 %s26, 1
      %s28 = scalar_select %p25, %s26, %s27
      %p31 = pneg %p25
      %p32 = scmp.eq.s32.totalorder %s16, 1
      %p33 = por %p31, %p32
      %p34 = scmp.ne.s32.totalorder %s26, %s29
      %p35 = scmp.eq.s32.totalorder %s16, 0
      %p36 = por %p34, %p35
      %p37 = scmp.ne.s32.totalorder %s26, %s29
      %p38 = scmp.eq.s32.totalorder %s21, 1
      %p39 = por %p37, %p38
      %p40 = scmp.ne.s32.totalorder %s29, %s30
      %p41 = scmp.eq.s32.totalorder %s21, 0
      %p42 = por %p40, %p41
      %p43 = scmp.ne.s32.totalorder %s29, %s30
      %p44 = scmp.eq.s32.totalorder %s22, 1
      %p45 = por %p43, %p44
      %p47 = scmp.ne.s32.totalorder %s30, %s46
      %p48 = scmp.eq.s32.totalorder %s22, 0
      %p49 = por %p47, %p48
      %s50 = ssub.s32 %s16, %s23
      %p51 = scmp.eq.s32.totalorder %s50, 0
      %s53 = sadd.s32 %s52, 1
      %s54 = scalar_select %p51, %s52, %s53
      %p57 = pneg %p51
      %p58 = scmp.eq.s32.totalorder %s16, 1
      %p59 = por %p57, %p58
      %p60 = scmp.ne.s32.totalorder %s52, %s55
      %p61 = scmp.eq.s32.totalorder %s16, 0
      %p62 = por %p60, %p61
      %p63 = scmp.ne.s32.totalorder %s52, %s55
      %p64 = scmp.eq.s32.totalorder %s21, 1
      %p65 = por %p63, %p64
      %p66 = scmp.ne.s32.totalorder %s55, %s56
      %p67 = scmp.eq.s32.totalorder %s21, 0
      %p68 = por %p66, %p67
      %p69 = scmp.ne.s32.totalorder %s55, %s56
      %p70 = scmp.eq.s32.totalorder %s22, 1
      %p71 = por %p69, %p70
      %p73 = scmp.ne.s32.totalorder %s56, %s72
      %p74 = scmp.eq.s32.totalorder %s22, 0
      %p75 = por %p73, %p74
      %s76 = ssub.s32 %s16, %s23
      %p77 = scmp.eq.s32.totalorder %s76, 0
      %s79 = sadd.s32 %s78, 1
      %s80 = scalar_select %p77, %s78, %s79
      %p83 = pneg %p77
      %p84 = scmp.eq.s32.totalorder %s16, 1
      %p85 = por %p83, %p84
      %p86 = scmp.ne.s32.totalorder %s78, %s81
      %p87 = scmp.eq.s32.totalorder %s16, 0
      %p88 = por %p86, %p87
      %p89 = scmp.ne.s32.totalorder %s78, %s81
      %p90 = scmp.eq.s32.totalorder %s21, 1
      %p91 = por %p89, %p90
      %p92 = scmp.ne.s32.totalorder %s81, %s82
      %p93 = scmp.eq.s32.totalorder %s21, 0
      %p94 = por %p92, %p93
      %p95 = scmp.ne.s32.totalorder %s81, %s82
      %p96 = scmp.eq.s32.totalorder %s22, 1
      %p97 = por %p95, %p96
      %p99 = scmp.ne.s32.totalorder %s82, %s98
      %p100 = scmp.eq.s32.totalorder %s22, 0
      %p101 = por %p99, %p100
      %s103 = sadd.s32 %s102, 1
      %p106 = scmp.eq.s32.totalorder %s16, 1
      %p107 = scmp.ne.s32.totalorder %s102, %s104
      %p108 = scmp.eq.s32.totalorder %s16, 0
      %p109 = por %p107, %p108
      %p110 = scmp.ne.s32.totalorder %s102, %s104
      %p111 = scmp.eq.s32.totalorder %s21, 1
      %p112 = por %p110, %p111
      %p113 = scmp.ne.s32.totalorder %s104, %s105
      %p114 = scmp.eq.s32.totalorder %s21, 0
      %p115 = por %p113, %p114
      %p116 = scmp.ne.s32.totalorder %s104, %s105
      %p117 = scmp.eq.s32.totalorder %s22, 1
      %p118 = por %p116, %p117
      %p120 = scmp.ne.s32.totalorder %s105, %s119
      %p121 = scmp.eq.s32.totalorder %s22, 0
      %p122 = por %p120, %p121
      %s124 = sadd.s32 %s123, 1
      %p127 = scmp.eq.s32.totalorder %s16, 1
      %p128 = scmp.ne.s32.totalorder %s123, %s125
      %p129 = scmp.eq.s32.totalorder %s16, 0
      %p130 = por %p128, %p129
      %p131 = scmp.ne.s32.totalorder %s123, %s125
      %p132 = scmp.eq.s32.totalorder %s21, 1
      %p133 = por %p131, %p132
      %p134 = scmp.ne.s32.totalorder %s125, %s126
      %p135 = scmp.eq.s32.totalorder %s21, 0
      %p136 = por %p134, %p135
      %p137 = scmp.ne.s32.totalorder %s125, %s126
      %p138 = scmp.eq.s32.totalorder %s22, 1
      %p139 = por %p137, %p138
      %p141 = scmp.ne.s32.totalorder %s126, %s140
      %p142 = scmp.eq.s32.totalorder %s22, 0
      %p143 = por %p141, %p142
      %s145 = sadd.s32 %s144, 1
      %p148 = scmp.eq.s32.totalorder %s16, 1
      %p149 = scmp.ne.s32.totalorder %s144, %s146
      %p150 = scmp.eq.s32.totalorder %s16, 0
      %p151 = por %p149, %p150
      %p152 = scmp.ne.s32.totalorder %s144, %s146
      %p153 = scmp.eq.s32.totalorder %s21, 1
      %p154 = por %p152, %p153
      %p155 = scmp.ne.s32.totalorder %s146, %s147
      %p156 = scmp.eq.s32.totalorder %s21, 0
      %p157 = por %p155, %p156
      %p158 = scmp.ne.s32.totalorder %s146, %s147
      %p159 = scmp.eq.s32.totalorder %s22, 1
      %p160 = por %p158, %p159
      %p162 = scmp.ne.s32.totalorder %s147, %s161
      %p163 = scmp.eq.s32.totalorder %s22, 0
      %p164 = por %p162, %p163
      %s166 = sadd.s32 %s165, 1
      %p169 = scmp.eq.s32.totalorder %s16, 1
      %p170 = scmp.ne.s32.totalorder %s165, %s167
      %p171 = scmp.eq.s32.totalorder %s16, 0
      %p172 = por %p170, %p171
      %p173 = scmp.ne.s32.totalorder %s165, %s167
      %p174 = scmp.eq.s32.totalorder %s21, 1
      %p175 = por %p173, %p174
      %p176 = scmp.ne.s32.totalorder %s167, %s168
      %p177 = scmp.eq.s32.totalorder %s21, 0
      %p178 = por %p176, %p177
      %p179 = scmp.ne.s32.totalorder %s167, %s168
      %p180 = scmp.eq.s32.totalorder %s22, 1
      %p181 = por %p179, %p180
      %p183 = scmp.ne.s32.totalorder %s168, %s182
      %p184 = scmp.eq.s32.totalorder %s22, 0
      %p185 = por %p183, %p184
      %s186 = ssub.s32 %s16, %s23
      %p187 = scmp.eq.s32.totalorder %s186, 0
      %s189 = sadd.s32 %s188, 1
      %s190 = scalar_select %p187, %s188, %s189
      %p193 = pneg %p187
      %p194 = scmp.eq.s32.totalorder %s16, 1
      %p195 = por %p193, %p194
      %p196 = scmp.ne.s32.totalorder %s188, %s191
      %p197 = scmp.eq.s32.totalorder %s16, 0
      %p198 = por %p196, %p197
      %p199 = scmp.ne.s32.totalorder %s188, %s191
      %p200 = scmp.eq.s32.totalorder %s21, 1
      %p201 = por %p199, %p200
      %p202 = scmp.ne.s32.totalorder %s191, %s192
      %p203 = scmp.eq.s32.totalorder %s21, 0
      %p204 = por %p202, %p203
      %p205 = scmp.ne.s32.totalorder %s191, %s192
      %p206 = scmp.eq.s32.totalorder %s22, 1
      %p207 = por %p205, %p206
      %p209 = scmp.ne.s32.totalorder %s192, %s208
      %p210 = scmp.eq.s32.totalorder %s22, 0
      %p211 = por %p209, %p210
      %p212 = scmp.le.s32.totalorder 1, %s16
      %p213 = scmp.lt.s32.totalorder %s16, 3
      %p214 = pnand %p212, %p213
      %p215 = pneg %p214
      // Predicated region
      $region9: #{single_stream_block.1} parent=5 // pred_check
        _
      $region10: #{single_stream_block.1} parent=5 // pred_check_branch
        %217 = sbr.rel (%p214) target = $region12
      $region11: #{single_stream_block.1} parent=5 // pred_region
        %s218 = ssub.s32 %s16, 1
        // Predicated region
        $region13: #{single_stream_block.1} parent=11 // pred_check
          %p219 = pneg %p115
        $region14: #{single_stream_block.1} parent=11 // pred_check_branch
          %221 = sbr.rel (%p219) target = $region16
        $region15: #{single_stream_block.1} parent=11 // pred_region
          _
        $region16: #{single_stream_block.1} parent=11 // pred_fallthru
          _
        // Predicated region
        $region17: #{single_stream_block.1} parent=11 // pred_check
          %p222 = pneg %p136
        $region18: #{single_stream_block.1} parent=11 // pred_check_branch
          %224 = sbr.rel (%p222) target = $region20
        $region19: #{single_stream_block.1} parent=11 // pred_region
          _
        $region20: #{single_stream_block.1} parent=11 // pred_fallthru
          _
        // Predicated region
        $region21: #{single_stream_block.1} parent=11 // pred_check
          %p225 = pneg %p157
        $region22: #{single_stream_block.1} parent=11 // pred_check_branch
          %227 = sbr.rel (%p225) target = $region24
        $region23: #{single_stream_block.1} parent=11 // pred_region
          _
        $region24: #{single_stream_block.1} parent=11 // pred_fallthru
          _
        // Predicated region
        $region25: #{single_stream_block.1} parent=11 // pred_check
          %p228 = pneg %p178
        $region26: #{single_stream_block.1} parent=11 // pred_check_branch
          %230 = sbr.rel (%p228) target = $region28
        $region27: #{single_stream_block.1} parent=11 // pred_region
          _
        $region28: #{single_stream_block.1} parent=11 // pred_fallthru
          _
      $region12: #{single_stream_block.1} parent=5 // pred_fallthru
        _
      %p231 = scmp.lt.s32.totalorder %s16, 2
      // Predicated region
      $region29: #{single_stream_block.1} parent=5 // pred_check
        %p232 = pneg %p231
      $region30: #{single_stream_block.1} parent=5 // pred_check_branch
        %234 = sbr.rel (%p232) target = $region32
      $region31: #{single_stream_block.1} parent=5 // pred_region
        // Predicated region
        $region33: #{single_stream_block.1} parent=31 // pred_check
          %p235 = pneg %p36
        $region34: #{single_stream_block.1} parent=31 // pred_check_branch
          %237 = sbr.rel (%p235) target = $region36
        $region35: #{single_stream_block.1} parent=31 // pred_region
          %p238 = scmp.lt.s32.totalorder %s16, 1
          %s239 = scalar_select %p238, %s16, 1
          %s240 = smul.addr %s239, 8
          %s241 = scalar_lea.vmem %s0, %s240
        $region36: #{single_stream_block.1} parent=31 // pred_fallthru
          _
        // Predicated region
        $region37: #{single_stream_block.1} parent=31 // pred_check
          %p242 = pneg %p62
        $region38: #{single_stream_block.1} parent=31 // pred_check_branch
          %244 = sbr.rel (%p242) target = $region40
        $region39: #{single_stream_block.1} parent=31 // pred_region
          %p245 = scmp.lt.s32.totalorder %s16, 1
          %s246 = scalar_select %p245, %s16, 1
          %s247 = scalar_lea.vmem %s1, %s246
        $region40: #{single_stream_block.1} parent=31 // pred_fallthru
          _
        // Predicated region
        $region41: #{single_stream_block.1} parent=31 // pred_check
          %p248 = pneg %p88
        $region42: #{single_stream_block.1} parent=31 // pred_check_branch
          %250 = sbr.rel (%p248) target = $region44
        $region43: #{single_stream_block.1} parent=31 // pred_region
          %p251 = scmp.lt.s32.totalorder %s16, 1
          %s252 = scalar_select %p251, %s16, 1
          %s253 = smul.addr %s252, 8
          %s254 = scalar_lea.vmem %s2, %s253
        $region44: #{single_stream_block.1} parent=31 // pred_fallthru
          _
      $region32: #{single_stream_block.1} parent=5 // pred_fallthru
        _
      %p255 = scmp.le.s32.totalorder 1, %s16
      %p256 = scmp.lt.s32.totalorder %s16, 3
      %p257 = pnand %p255, %p256
      %p258 = pneg %p257
      // Predicated region
      $region45: #{single_stream_block.1} parent=5 // pred_check
        _
      $region46: #{single_stream_block.1} parent=5 // pred_check_branch
        %260 = sbr.rel (%p257) target = $region48
      $region47: #{single_stream_block.1} parent=5 // pred_region
        %s261 = ssub.s32 %s16, 1
        %p262 = scmp.lt.s32.totalorder %s21, 1
        %s263 = scalar_select %p262, %s21, 1
        %s264 = smul.addr %s263, 8
        %s265 = scalar_lea.vmem %s0, %s264
        %p266 = pneg %p42
        %p267 = pneg %p39
        %p268 = scmp.lt.s32.totalorder %s21, 1
        %s269 = scalar_select %p268, %s21, 1
        %s270 = scalar_lea.vmem %s1, %s269
        %p271 = pneg %p68
        %p272 = pneg %p65
        %p273 = scmp.lt.s32.totalorder %s21, 1
        %s274 = scalar_select %p273, %s21, 1
        %s275 = smul.addr %s274, 8
        %s276 = scalar_lea.vmem %s2, %s275
        %p277 = pneg %p94
        %p278 = pneg %p91
        %p279 = pneg %p115
        %p280 = pneg %p112
        %p281 = pneg %p136
        %p282 = pneg %p133
        %p283 = pneg %p157
        %p284 = pneg %p154
        %p285 = pneg %p178
        %p286 = pneg %p175
        %p287 = pneg %p204
        %p288 = pneg %p201
        %s289 = sand.u32 %s191, 1
        %s290 = scalar_lea.sflag [#allocation3], %s289
        %s291 = sand.u32 %s191, 1
        %s292 = smul.addr %s291, 8
        %s293 = scalar_lea.vmem [#allocation2], %s292
        %p294 = scmp.lt.s32.totalorder %s21, 1
        %s295 = scalar_select %p294, %s21, 1
        %s296 = smul.addr %s295, 8
        %s297 = scalar_lea.vmem %s0, %s296
        %p298 = scmp.lt.s32.totalorder %s21, 1
        %s299 = scalar_select %p298, %s21, 1
        %s300 = scalar_lea.vmem %s1, %s299
        %p301 = scmp.lt.s32.totalorder %s21, 1
        %s302 = scalar_select %p301, %s21, 1
        %s303 = smul.addr %s302, 8
        %s304 = scalar_lea.vmem %s2, %s303
        %v306 = vld [vmem:[%s297] sm:$0xff]
        %v307 = vld [vmem:[%s300] sm:$0x1]
        %v308 = vxor.u32 %v307, 2147483648
        %v309 = vmul.f32 %v308, 1.442695
        %v310 = vpow.pop %v309
        %v311 = vadd.f32 %v310, 1.0
        %v312 = vrcp.pop %v311
        %v313 = vmul.f32 1.0, %v312
        %v314 = vmul.f32 %v307, %v313
        %v315 = vpack.c.bf16 %v314, %v314
        %v316 = vld [vmem:[%s4] sm:$0xff]
        %v317 = vld [vmem:[%s4 + $0x8] sm:$0xff]
        %v318 = vld [vmem:[%s4 + $0x10] sm:$0xff]
        %v319 = vld [vmem:[%s4 + $0x18] sm:$0xff]
        %v320 = vpack.c.bf16 %v317, %v316
        %v321 = vpack.c.bf16 %v319, %v318
        %v322 = vld [vmem:[%s6 + $0x1] sm:$0x1]
        %vm323 = vcmask 261120
        %v325 = vsel %vm323, %v315, 0
        %327 = vmatprep.subr.bf16.mxu0 0
        %328 = vmatpush1.bf16.msra.mxu0 %v320
        %329 = vmatprep.subr.bf16.mxu0 0
        %330 = vmatpush1.bf16.msra.mxu0 %v321
        %331 = vmatprep.subr.bf16.mxu0 0
        %332 = vmatpush1.bf16.msra.mxu0 0
        %333 = vmatprep.subr.bf16.mxu0 0
        %334 = vmatpush1.bf16.msra.mxu0 0
        %335 = vmatprep.subr.bf16.mxu0 0
        %336 = vmatpush1.bf16.msra.mxu0 0
        %337 = vmatprep.subr.bf16.mxu0 0
        %338 = vmatpush1.bf16.msra.mxu0 0
        %339 = vmatprep.subr.bf16.mxu0 0
        %340 = vmatpush1.bf16.msra.mxu0 0
        %341 = vmatprep.subr.bf16.mxu0 0
        %342 = vmatpush1.bf16.msra.mxu0 0
        %343 = vmatprep.subr.bf16.mxu0 0
        %344 = vmatpush1.bf16.msra.mxu0 0
        %345 = vmatprep.subr.bf16.mxu0 0
        %346 = vmatpush1.bf16.msra.mxu0 0
        %347 = vmatprep.subr.bf16.mxu0 0
        %348 = vmatpush1.bf16.msra.mxu0 0
        %349 = vmatprep.subr.bf16.mxu0 0
        %350 = vmatpush1.bf16.msra.mxu0 0
        %351 = vmatprep.subr.bf16.mxu0 0
        %352 = vmatpush1.bf16.msra.mxu0 0
        %353 = vmatprep.subr.bf16.mxu0 0
        %354 = vmatpush1.bf16.msra.mxu0 0
        %355 = vmatprep.subr.bf16.mxu0 0
        %356 = vmatpush1.bf16.msra.mxu0 0
        %357 = vmatprep.subr.bf16.mxu0 0
        %358 = vmatpush1.bf16.msra.mxu0 0
        %359 = vmatprep.mubr.bf16.mxu0 0
        %360 = vmatmul.mubr.bf16.gmra.mrb[0].mxu0 %v325
        %v361 = vpop.f32.mrb[0].mxu0
        %v362 = vadd.f32 %v322, %v361
        %v363 = vpop.f32.mrb[0].mxu0
        %v364 = vpop.f32.mrb[0].mxu0
        %v365 = vpop.f32.mrb[0].mxu0
        %366 = vdwg.mxu0
        %v367 = vsel %vm323, %v306, 0.0
        %368 = vadd.xlane.f32.xlu0 %v367
        %v369 = vpop.xlane.xlu0 %368
        %v370 = vrcp.pop 32.0
        %v371 = vmul.f32 %v369, %v370
        %v372 = vsub.f32 %v306, %v371
        %v373 = vmul.f32 %v372, %v372
        %v374 = vsel %vm323, %v373, 0.0
        %375 = vadd.xlane.f32.xlu0 %v374
        %v376 = vpop.xlane.xlu0 %375
        %v377 = vmul.f32 %v376, %v370
        %v378 = vadd.f32 %v362, 1.0
        %v379 = vadd.f32 %v377, 1e-06
        %v380 = vrsqrt.pop %v379
        %v381 = vmul.f32 %v372, %v380
        %v382 = vlaneseq
        %v383 = vshrl.u32 %v382, 7
        %v384 = vsub.s32 0, %v383
        %v385 = vrot.slane %v378, %v384
        %387 = vrot.lane.b32.xlu0 %v381, 32
        %v388 = vpop.permute.xlu0 %387
        %v390 = vmul.f32 %v385, %v388
        %v391 = vlaneseq
        %v392 = vshrl.u32 %v391, 7
        %v393 = vsub.s32 0, %v392
        %v394 = vrot.slane %v362, %v393
        %396 = vrot.lane.b32.xlu0 %v394, 32
        %v397 = vpop.permute.xlu0 %396
        %v399 = vadd.f32 %v390, %v397
        %v400 = vpack.c.bf16 %v399, %v399
        %v401 = vld [vmem:[%s3] sm:$0xff]
        %v402 = vld [vmem:[%s3 + $0x8] sm:$0xff]
        %v403 = vld [vmem:[%s3 + $0x10] sm:$0xff]
        %v404 = vld [vmem:[%s3 + $0x18] sm:$0xff]
        %v405 = vld [vmem:[%s3 + $0x20] sm:$0xff]
        %v406 = vld [vmem:[%s3 + $0x28] sm:$0xff]
        %v407 = vld [vmem:[%s3 + $0x30] sm:$0xff]
        %v408 = vld [vmem:[%s3 + $0x38] sm:$0xff]
        %v409 = vpack.c.bf16 %v403, %v401
        %v410 = vpack.c.bf16 %v404, %v402
        %v411 = vpack.c.bf16 %v407, %v405
        %v412 = vpack.c.bf16 %v408, %v406
        %v413 = vld [vmem:[%s6] ss:$4 sm:$0x3]
        %v415 = vlaneseq
        %v416 = vshrl.u32 %v415, 7
        %v417 = vsub.s32 0, %v416
        %v418 = vrot.slane %v413, %v417
        %v419 = vlaneseq
        %v420 = vshrl.u32 %v419, 7
        %v421 = vsub.s32 1, %v420
        %v422 = vrot.slane %v413, %v421
        %426 = vrot.lane.b32.xlu0 %v400, 96
        %v427 = vpop.permute.xlu0 %426
        %v429 = vsel %vm323, %v427, 0
        %431 = vmatprep.subr.bf16.mxu0 %v410
        %432 = vmatpush1.bf16.msra.mxu0 %v409
        %433 = vmatprep.subr.bf16.mxu0 %v412
        %434 = vmatpush1.bf16.msra.mxu0 %v411
        %435 = vmatprep.subr.bf16.mxu0 0
        %436 = vmatpush1.bf16.msra.mxu0 0
        %437 = vmatprep.subr.bf16.mxu0 0
        %438 = vmatpush1.bf16.msra.mxu0 0
        %439 = vmatprep.subr.bf16.mxu0 0
        %440 = vmatpush1.bf16.msra.mxu0 0
        %441 = vmatprep.subr.bf16.mxu0 0
        %442 = vmatpush1.bf16.msra.mxu0 0
        %443 = vmatprep.subr.bf16.mxu0 0
        %444 = vmatpush1.bf16.msra.mxu0 0
        %445 = vmatprep.subr.bf16.mxu0 0
        %446 = vmatpush1.bf16.msra.mxu0 0
        %447 = vmatprep.subr.bf16.mxu0 0
        %448 = vmatpush1.bf16.msra.mxu0 0
        %449 = vmatprep.subr.bf16.mxu0 0
        %450 = vmatpush1.bf16.msra.mxu0 0
        %451 = vmatprep.subr.bf16.mxu0 0
        %452 = vmatpush1.bf16.msra.mxu0 0
        %453 = vmatprep.subr.bf16.mxu0 0
        %454 = vmatpush1.bf16.msra.mxu0 0
        %455 = vmatprep.subr.bf16.mxu0 0
        %456 = vmatpush1.bf16.msra.mxu0 0
        %457 = vmatprep.subr.bf16.mxu0 0
        %458 = vmatpush1.bf16.msra.mxu0 0
        %459 = vmatprep.subr.bf16.mxu0 0
        %460 = vmatpush1.bf16.msra.mxu0 0
        %461 = vmatprep.subr.bf16.mxu0 0
        %462 = vmatpush1.bf16.msra.mxu0 0
        %463 = vmatprep.mubr.bf16.mxu0 0
        %464 = vmatmul.mubr.bf16.gmra.mrb[0].mxu0 %v429
        %v465 = vpop.f32.mrb[0].mxu0
        %v466 = vadd.f32 %v418, %v465
        %v467 = vpop.f32.mrb[0].mxu0
        %v468 = vadd.f32 %v422, %v467
        %v469 = vpop.f32.mrb[0].mxu0
        %v470 = vpop.f32.mrb[0].mxu0
        %471 = vdwg.mxu0
        %v472 = vmul.f32 %v466, 0.5
        %v473 = vmul.f32 %v468, 0.5
        %v474 = vmul.f32 %v466, 0.044715
        %v475 = vmul.f32 %v468, 0.044715
        %v476 = vmul.f32 %v474, %v466
        %v477 = vmul.f32 %v475, %v468
        %v478 = vmul.f32 %v476, %v466
        %v479 = vmul.f32 %v477, %v468
        %v480 = vadd.f32 %v466, %v478
        %v481 = vadd.f32 %v468, %v479
        %v482 = vmul.f32 %v480, 0.7978846
        %v483 = vmul.f32 %v481, 0.7978846
        %v484 = vtanh.pop %v482
        %v485 = vtanh.pop %v483
        %v486 = vadd.f32 %v484, 1.0
        %v487 = vadd.f32 %v485, 1.0
        %v488 = vmul.f32 %v472, %v486
        %v489 = vmul.f32 %v473, %v487
        %v490 = vpack.c.bf16 %v488, %v488
        %v491 = vpack.c.bf16 %v489, %v489
        %v492 = vld [vmem:[%s5 + $0x40] sm:$0xff]
        %v493 = vld [vmem:[%s5 + $0x48] sm:$0xff]
        %v494 = vld [vmem:[%s5 + $0x50] sm:$0xff]
        %v495 = vld [vmem:[%s5 + $0x58] sm:$0xff]
        %v496 = vld [vmem:[%s5 + $0x60] sm:$0xff]
        %v497 = vld [vmem:[%s5 + $0x68] sm:$0xff]
        %v498 = vld [vmem:[%s5 + $0x70] sm:$0xff]
        %v499 = vld [vmem:[%s5 + $0x78] sm:$0xff]
        %v500 = vpack.c.bf16 %v493, %v492
        %v501 = vpack.c.bf16 %v495, %v494
        %v502 = vpack.c.bf16 %v497, %v496
        %v503 = vpack.c.bf16 %v499, %v498
        %v504 = vld [vmem:[%s6 + $0x2] sm:$0x1]
        %v505 = vlaneseq
        %v506 = vshrl.u32 %v505, 7
        %v507 = vsub.s32 0, %v506
        %v508 = vrot.slane %v504, %v507
        %511 = vrot.lane.b32.xlu0 %v490, 32
        %v512 = vpop.permute.xlu0 %511
        %513 = vrot.lane.b32.xlu0 %v491, 32
        %v514 = vpop.permute.xlu0 %513
        %vm515 = vcmask 261120
        %v516 = vsel %vm515, %v512, %v514
        %vm517 = vcmask 523264
        %v519 = vsel %vm517, %v516, 0
        %521 = vmatprep.subr.bf16.mxu0 0
        %522 = vmatpush1.bf16.msra.mxu0 %v500
        %523 = vmatprep.subr.bf16.mxu0 0
        %524 = vmatpush1.bf16.msra.mxu0 %v501
        %525 = vmatprep.subr.bf16.mxu0 0
        %526 = vmatpush1.bf16.msra.mxu0 %v502
        %527 = vmatprep.subr.bf16.mxu0 0
        %528 = vmatpush1.bf16.msra.mxu0 %v503
        %529 = vmatprep.subr.bf16.mxu0 0
        %530 = vmatpush1.bf16.msra.mxu0 0
        %531 = vmatprep.subr.bf16.mxu0 0
        %532 = vmatpush1.bf16.msra.mxu0 0
        %533 = vmatprep.subr.bf16.mxu0 0
        %534 = vmatpush1.bf16.msra.mxu0 0
        %535 = vmatprep.subr.bf16.mxu0 0
        %536 = vmatpush1.bf16.msra.mxu0 0
        %537 = vmatprep.subr.bf16.mxu0 0
        %538 = vmatpush1.bf16.msra.mxu0 0
        %539 = vmatprep.subr.bf16.mxu0 0
        %540 = vmatpush1.bf16.msra.mxu0 0
        %541 = vmatprep.subr.bf16.mxu0 0
        %542 = vmatpush1.bf16.msra.mxu0 0
        %543 = vmatprep.subr.bf16.mxu0 0
        %544 = vmatpush1.bf16.msra.mxu0 0
        %545 = vmatprep.subr.bf16.mxu0 0
        %546 = vmatpush1.bf16.msra.mxu0 0
        %547 = vmatprep.subr.bf16.mxu0 0
        %548 = vmatpush1.bf16.msra.mxu0 0
        %549 = vmatprep.subr.bf16.mxu0 0
        %550 = vmatpush1.bf16.msra.mxu0 0
        %551 = vmatprep.subr.bf16.mxu0 0
        %552 = vmatpush1.bf16.msra.mxu0 0
        %553 = vmatprep.mubr.bf16.mxu0 0
        %554 = vmatmul.mubr.bf16.gmra.mrb[0].mxu0 %v519
        %v555 = vpop.f32.mrb[0].mxu0
        %v556 = vadd.f32 %v508, %v555
        %v557 = vpop.f32.mrb[0].mxu0
        %v558 = vpop.f32.mrb[0].mxu0
        %v559 = vpop.f32.mrb[0].mxu0
        %560 = vdwg.mxu0
        %v561 = vmul.f32 %v556, 0.5
        %v562 = vmul.f32 %v556, 0.044715
        %v563 = vmul.f32 %v562, %v556
        %v564 = vmul.f32 %v563, %v556
        %v565 = vadd.f32 %v556, %v564
        %v566 = vmul.f32 %v565, 0.7978846
        %v567 = vtanh.pop %v566
        %v568 = vadd.f32 %v567, 1.0
        %v569 = vmul.f32 %v561, %v568
        %v570 = vld [vmem:[%s304] sm:$0xff]
        %v571 = vmul.f32 %v570, %v466
        %573 = vrot.lane.b32.xlu0 %v466, 120
        %v574 = vpop.permute.xlu0 %573
        %576 = vrot.lane.b32.xlu0 %v466, 8
        %v577 = vpop.permute.xlu0 %576
        %vm579 = vcmask 64512
        %v580 = vsel %vm579, %v574, %v577
        %vm581 = vcmask 130048
        %v582 = vsel %vm581, %v580, %v574
        %vm583 = vcmask 195584
        %v584 = vsel %vm583, %v582, %v577
        %586 = vrot.lane.b32.xlu0 %v584, 32
        %v587 = vpop.permute.xlu0 %586
        %v589 = vmul.f32 %v570, %v587
        %591 = vrot.lane.b32.xlu0 %v589, 96
        %v592 = vpop.permute.xlu0 %591
        %v594 = vadd.f32 %v571, %v592
        %595 = vrot.lane.b32.xlu0 %v466, 32
        %v596 = vpop.permute.xlu0 %595
        %v598 = vmul.f32 %v570, %v596
        %599 = vrot.lane.b32.xlu0 %v466, 88
        %v600 = vpop.permute.xlu0 %599
        %602 = vrot.lane.b32.xlu0 %v466, 104
        %v603 = vpop.permute.xlu0 %602
        %v605 = vsel %vm579, %v600, %v603
        %v606 = vsel %vm581, %v605, %v600
        %v607 = vsel %vm583, %v606, %v603
        %609 = vrot.lane.b32.xlu0 %v607, 96
        %v610 = vpop.permute.xlu0 %609
        %v612 = vmul.f32 %v570, %v610
        %614 = vrot.lane.b32.xlu0 %v612, 96
        %v615 = vpop.permute.xlu0 %614
        %v617 = vadd.f32 %v598, %v615
        %v618 = vpack.c.bf16 %v569, %v569
        %v619 = vld [vmem:[%s5 + $0x20] sm:$0xff]
        %v620 = vld [vmem:[%s5 + $0x28] sm:$0xff]
        %v621 = vld [vmem:[%s5 + $0x30] sm:$0xff]
        %v622 = vld [vmem:[%s5 + $0x38] sm:$0xff]
        %v623 = vpack.c.bf16 %v620, %v619
        %v624 = vpack.c.bf16 %v622, %v621
        %v625 = vld [vmem:[%s6 + $0x3] sm:$0x1]
        %v626 = vlaneseq
        %v627 = vshrl.u32 %v626, 7
        %v628 = vsub.s32 0, %v627
        %v629 = vrot.slane %v625, %v628
        %v631 = vsel %vm323, %v618, 0
        %633 = vmatprep.subr.bf16.mxu0 0
        %634 = vmatpush1.bf16.msra.mxu0 %v623
        %635 = vmatprep.subr.bf16.mxu0 0
        %636 = vmatpush1.bf16.msra.mxu0 %v624
        %637 = vmatprep.subr.bf16.mxu0 0
        %638 = vmatpush1.bf16.msra.mxu0 0
        %639 = vmatprep.subr.bf16.mxu0 0
        %640 = vmatpush1.bf16.msra.mxu0 0
        %641 = vmatprep.subr.bf16.mxu0 0
        %642 = vmatpush1.bf16.msra.mxu0 0
        %643 = vmatprep.subr.bf16.mxu0 0
        %644 = vmatpush1.bf16.msra.mxu0 0
        %645 = vmatprep.subr.bf16.mxu0 0
        %646 = vmatpush1.bf16.msra.mxu0 0
        %647 = vmatprep.subr.bf16.mxu0 0
        %648 = vmatpush1.bf16.msra.mxu0 0
        %649 = vmatprep.subr.bf16.mxu0 0
        %650 = vmatpush1.bf16.msra.mxu0 0
        %651 = vmatprep.subr.bf16.mxu0 0
        %652 = vmatpush1.bf16.msra.mxu0 0
        %653 = vmatprep.subr.bf16.mxu0 0
        %654 = vmatpush1.bf16.msra.mxu0 0
        %655 = vmatprep.subr.bf16.mxu0 0
        %656 = vmatpush1.bf16.msra.mxu0 0
        %657 = vmatprep.subr.bf16.mxu0 0
        %658 = vmatpush1.bf16.msra.mxu0 0
        %659 = vmatprep.subr.bf16.mxu0 0
        %660 = vmatpush1.bf16.msra.mxu0 0
        %661 = vmatprep.subr.bf16.mxu0 0
        %662 = vmatpush1.bf16.msra.mxu0 0
        %663 = vmatprep.subr.bf16.mxu0 0
        %664 = vmatpush1.bf16.msra.mxu0 0
        %665 = vmatprep.mubr.bf16.mxu0 0
        %666 = vmatmul.mubr.bf16.gmra.mrb[0].mxu0 %v631
        %v667 = vpop.f32.mrb[0].mxu0
        %v668 = vadd.f32 %v629, %v667
        %v669 = vpop.f32.mrb[0].mxu0
        %v670 = vpop.f32.mrb[0].mxu0
        %v671 = vpop.f32.mrb[0].mxu0
        %672 = vdwg.mxu0
        %v673 = vmul.f32 %v466, %v466
        %v674 = vsel %vm581, %v673, 0.0
        %675 = vadd.xlane.f32.xlu0 %v674
        %v676 = vpop.xlane.xlu0 %675
        %v677 = vrcp.pop 16.0
        %v678 = vmul.f32 %v676, %v677
        %v679 = vadd.f32 %v678, 1.1920929e-07
        %v680 = vrsqrt.pop %v679
        %682 = vrot.lane.b32.xlu0 %v673, 96
        %v683 = vpop.permute.xlu0 %682
        %v685 = vsel %vm581, %v683, 0.0
        %686 = vadd.xlane.f32.xlu0 %v685
        %v687 = vpop.xlane.xlu0 %686
        %v688 = vmul.f32 %v687, %v677
        %v689 = vadd.f32 %v688, 1.1920929e-07
        %v690 = vrsqrt.pop %v689
        %v691 = vmul.f32 %v594, %v680
        %v692 = vpack.c.bf16 %v691, %v691
        %v693 = vmul.f32 %v617, %v690
        %v694 = vpack.c.bf16 %v693, %v693
        %696 = vrot.lane.b32.xlu0 %v694, 64
        %v697 = vpop.permute.xlu0 %696
        %v699 = vsel %vm581, %v692, 0
        %v702 = vsel %vm581, %v697, 0
        %704 = vmatprep.subr.bf16.mxu0 0
        %705 = vmatpush1.bf16.xpose.msra.mxu0 %v702
        %706 = vmatprep.subr.bf16.mxu0 0
        %707 = vmatpush1.bf16.xpose.msra.mxu0 0
        %708 = vmatprep.subr.bf16.mxu0 0
        %709 = vmatpush1.bf16.xpose.msra.mxu0 0
        %710 = vmatprep.subr.bf16.mxu0 0
        %711 = vmatpush1.bf16.xpose.msra.mxu0 0
        %712 = vmatprep.subr.bf16.mxu0 0
        %713 = vmatpush1.bf16.xpose.msra.mxu0 0
        %714 = vmatprep.subr.bf16.mxu0 0
        %715 = vmatpush1.bf16.xpose.msra.mxu0 0
        %716 = vmatprep.subr.bf16.mxu0 0
        %717 = vmatpush1.bf16.xpose.msra.mxu0 0
        %718 = vmatprep.subr.bf16.mxu0 0
        %719 = vmatpush1.bf16.xpose.msra.mxu0 0
        %720 = vmatprep.subr.bf16.mxu0 0
        %721 = vmatpush1.bf16.xpose.msra.mxu0 0
        %722 = vmatprep.subr.bf16.mxu0 0
        %723 = vmatpush1.bf16.xpose.msra.mxu0 0
        %724 = vmatprep.subr.bf16.mxu0 0
        %725 = vmatpush1.bf16.xpose.msra.mxu0 0
        %726 = vmatprep.subr.bf16.mxu0 0
        %727 = vmatpush1.bf16.xpose.msra.mxu0 0
        %728 = vmatprep.subr.bf16.mxu0 0
        %729 = vmatpush1.bf16.xpose.msra.mxu0 0
        %730 = vmatprep.subr.bf16.mxu0 0
        %731 = vmatpush1.bf16.xpose.msra.mxu0 0
        %732 = vmatprep.subr.bf16.mxu0 0
        %733 = vmatpush1.bf16.xpose.msra.mxu0 0
        %734 = vmatprep.subr.bf16.mxu0 0
        %735 = vmatpush1.bf16.xpose.msra.mxu0 0
        %736 = vmatprep.mubr.bf16.mxu0 0
        %737 = vmatmul.mubr.bf16.gmra.mrb[0].mxu0 %v699
        %v738 = vpop.f32.mrb[0].mxu0
        %v739 = vadd.f32 0.0, %v738
        %v740 = vpop.f32.mrb[0].mxu0
        %v741 = vpop.f32.mrb[0].mxu0
        %v742 = vpop.f32.mrb[0].mxu0
        %743 = vdwg.mxu0
        %v744 = vmul.f32 %v739, 0.25
        %v745 = vsel %vm579, %v744, -inf
        %746 = vmax.xlane.f32.xlu0 %v745
        %v747 = vpop.xlane.xlu0 %746
        %v748 = vsub.f32 %v744, %v747
        %v749 = vmul.f32 %v748, 1.442695
        %v750 = vpow.pop %v749
        %v751 = vsel %vm579, %v750, 0.0
        %752 = vadd.xlane.f32.xlu0 %v751
        %v753 = vpop.xlane.xlu0 %752
        %v754 = vrcp.pop %v753
        %v755 = vmul.f32 %v750, %v754
        %v756 = vpack.c.bf16 %v755, %v755
        %v757 = vpack.c.bf16 %v466, %v466
        %759 = vrot.lane.b32.xlu0 %v757, 64
        %v760 = vpop.permute.xlu0 %759
        %v762 = vsel %vm579, %v756, 0
        %vm764 = vcmask 1043456
        %v766 = vsel %vm764, %v760, 0
        %768 = vmatprep.subr.bf16.mxu0 0
        %769 = vmatpush1.bf16.msra.mxu0 %v766
        %770 = vmatprep.subr.bf16.mxu0 0
        %771 = vmatpush1.bf16.msra.mxu0 0
        %772 = vmatprep.subr.bf16.mxu0 0
        %773 = vmatpush1.bf16.msra.mxu0 0
        %774 = vmatprep.subr.bf16.mxu0 0
        %775 = vmatpush1.bf16.msra.mxu0 0
        %776 = vmatprep.subr.bf16.mxu0 0
        %777 = vmatpush1.bf16.msra.mxu0 0
        %778 = vmatprep.subr.bf16.mxu0 0
        %779 = vmatpush1.bf16.msra.mxu0 0
        %780 = vmatprep.subr.bf16.mxu0 0
        %781 = vmatpush1.bf16.msra.mxu0 0
        %782 = vmatprep.subr.bf16.mxu0 0
        %783 = vmatpush1.bf16.msra.mxu0 0
        %784 = vmatprep.subr.bf16.mxu0 0
        %785 = vmatpush1.bf16.msra.mxu0 0
        %786 = vmatprep.subr.bf16.mxu0 0
        %787 = vmatpush1.bf16.msra.mxu0 0
        %788 = vmatprep.subr.bf16.mxu0 0
        %789 = vmatpush1.bf16.msra.mxu0 0
        %790 = vmatprep.subr.bf16.mxu0 0
        %791 = vmatpush1.bf16.msra.mxu0 0
        %792 = vmatprep.subr.bf16.mxu0 0
        %793 = vmatpush1.bf16.msra.mxu0 0
        %794 = vmatprep.subr.bf16.mxu0 0
        %795 = vmatpush1.bf16.msra.mxu0 0
        %796 = vmatprep.subr.bf16.mxu0 0
        %797 = vmatpush1.bf16.msra.mxu0 0
        %798 = vmatprep.subr.bf16.mxu0 0
        %799 = vmatpush1.bf16.msra.mxu0 0
        %800 = vmatprep.mubr.bf16.mxu0 0
        %801 = vmatmul.mubr.bf16.gmra.mrb[0].mxu0 %v762
        %v802 = vpop.f32.mrb[0].mxu0
        %v803 = vadd.f32 0.0, %v802
        %v804 = vpop.f32.mrb[0].mxu0
        %v805 = vpop.f32.mrb[0].mxu0
        %v806 = vpop.f32.mrb[0].mxu0
        %807 = vdwg.mxu0
        %v808 = vpack.c.bf16 %v803, %v803
        %v809 = vld [vmem:[%s5] sm:$0xff]
        %v810 = vld [vmem:[%s5 + $0x8] sm:$0xff]
        %v811 = vpack.c.bf16 %v810, %v809
        %v813 = vsel %vm581, %v808, 0
        %815 = vmatprep.subr.bf16.mxu0 0
        %816 = vmatpush1.bf16.msra.mxu0 %v811
        %817 = vmatprep.subr.bf16.mxu0 0
        %818 = vmatpush1.bf16.msra.mxu0 0
        %819 = vmatprep.subr.bf16.mxu0 0
        %820 = vmatpush1.bf16.msra.mxu0 0
        %821 = vmatprep.subr.bf16.mxu0 0
        %822 = vmatpush1.bf16.msra.mxu0 0
        %823 = vmatprep.subr.bf16.mxu0 0
        %824 = vmatpush1.bf16.msra.mxu0 0
        %825 = vmatprep.subr.bf16.mxu0 0
        %826 = vmatpush1.bf16.msra.mxu0 0
        %827 = vmatprep.subr.bf16.mxu0 0
        %828 = vmatpush1.bf16.msra.mxu0 0
        %829 = vmatprep.subr.bf16.mxu0 0
        %830 = vmatpush1.bf16.msra.mxu0 0
        %831 = vmatprep.subr.bf16.mxu0 0
        %832 = vmatpush1.bf16.msra.mxu0 0
        %833 = vmatprep.subr.bf16.mxu0 0
        %834 = vmatpush1.bf16.msra.mxu0 0
        %835 = vmatprep.subr.bf16.mxu0 0
        %836 = vmatpush1.bf16.msra.mxu0 0
        %837 = vmatprep.subr.bf16.mxu0 0
        %838 = vmatpush1.bf16.msra.mxu0 0
        %839 = vmatprep.subr.bf16.mxu0 0
        %840 = vmatpush1.bf16.msra.mxu0 0
        %841 = vmatprep.subr.bf16.mxu0 0
        %842 = vmatpush1.bf16.msra.mxu0 0
        %843 = vmatprep.subr.bf16.mxu0 0
        %844 = vmatpush1.bf16.msra.mxu0 0
        %845 = vmatprep.subr.bf16.mxu0 0
        %846 = vmatpush1.bf16.msra.mxu0 0
        %847 = vmatprep.mubr.bf16.mxu0 0
        %848 = vmatmul.mubr.bf16.gmra.mrb[0].mxu0 %v813
        %v849 = vpop.f32.mrb[0].mxu0
        %v850 = vadd.f32 0.0, %v849
        %v851 = vpop.f32.mrb[0].mxu0
        %v852 = vpop.f32.mrb[0].mxu0
        %v853 = vpop.f32.mrb[0].mxu0
        %854 = vdwg.mxu0
        %v855 = vadd.f32 %v668, %v850
        %856 = vrot.lane.b32.xlu0 %v673, 112
        %v857 = vpop.permute.xlu0 %856
        %v859 = vsel %vm581, %v857, 0.0
        %860 = vadd.xlane.f32.xlu0 %v859
        %v861 = vpop.xlane.xlu0 %860
        %v862 = vmul.f32 %v861, %v677
        %v863 = vadd.f32 %v862, 1.1920929e-07
        %v864 = vrsqrt.pop %v863
        %865 = vrot.lane.b32.xlu0 %v673, 80
        %v866 = vpop.permute.xlu0 %865
        %v868 = vsel %vm581, %v866, 0.0
        %869 = vadd.xlane.f32.xlu0 %v868
        %v870 = vpop.xlane.xlu0 %869
        %v871 = vmul.f32 %v870, %v677
        %v872 = vadd.f32 %v871, 1.1920929e-07
        %v873 = vrsqrt.pop %v872
        %v874 = vmul.f32 %v594, %v864
        %v875 = vpack.c.bf16 %v874, %v874
        %v876 = vmul.f32 %v617, %v873
        %v877 = vpack.c.bf16 %v876, %v876
        %879 = vrot.lane.b32.xlu0 %v875, 112
        %v880 = vpop.permute.xlu0 %879
        %882 = vrot.lane.b32.xlu0 %v877, 48
        %v883 = vpop.permute.xlu0 %882
        %v885 = vsel %vm581, %v880, 0
        %v888 = vsel %vm581, %v883, 0
        %890 = vmatprep.subr.bf16.mxu0 0
        %891 = vmatpush1.bf16.xpose.msra.mxu0 %v888
        %892 = vmatprep.subr.bf16.mxu0 0
        %893 = vmatpush1.bf16.xpose.msra.mxu0 0
        %894 = vmatprep.subr.bf16.mxu0 0
        %895 = vmatpush1.bf16.xpose.msra.mxu0 0
        %896 = vmatprep.subr.bf16.mxu0 0
        %897 = vmatpush1.bf16.xpose.msra.mxu0 0
        %898 = vmatprep.subr.bf16.mxu0 0
        %899 = vmatpush1.bf16.xpose.msra.mxu0 0
        %900 = vmatprep.subr.bf16.mxu0 0
        %901 = vmatpush1.bf16.xpose.msra.mxu0 0
        %902 = vmatprep.subr.bf16.mxu0 0
        %903 = vmatpush1.bf16.xpose.msra.mxu0 0
        %904 = vmatprep.subr.bf16.mxu0 0
        %905 = vmatpush1.bf16.xpose.msra.mxu0 0
        %906 = vmatprep.subr.bf16.mxu0 0
        %907 = vmatpush1.bf16.xpose.msra.mxu0 0
        %908 = vmatprep.subr.bf16.mxu0 0
        %909 = vmatpush1.bf16.xpose.msra.mxu0 0
        %910 = vmatprep.subr.bf16.mxu0 0
        %911 = vmatpush1.bf16.xpose.msra.mxu0 0
        %912 = vmatprep.subr.bf16.mxu0 0
        %913 = vmatpush1.bf16.xpose.msra.mxu0 0
        %914 = vmatprep.subr.bf16.mxu0 0
        %915 = vmatpush1.bf16.xpose.msra.mxu0 0
        %916 = vmatprep.subr.bf16.mxu0 0
        %917 = vmatpush1.bf16.xpose.msra.mxu0 0
        %918 = vmatprep.subr.bf16.mxu0 0
        %919 = vmatpush1.bf16.xpose.msra.mxu0 0
        %920 = vmatprep.subr.bf16.mxu0 0
        %921 = vmatpush1.bf16.xpose.msra.mxu0 0
        %922 = vmatprep.mubr.bf16.mxu0 0
        %923 = vmatmul.mubr.bf16.gmra.mrb[0].mxu0 %v885
        %v924 = vpop.f32.mrb[0].mxu0
        %v925 = vadd.f32 0.0, %v924
        %v926 = vpop.f32.mrb[0].mxu0
        %v927 = vpop.f32.mrb[0].mxu0
        %v928 = vpop.f32.mrb[0].mxu0
        %929 = vdwg.mxu0
        %v930 = vmul.f32 %v925, 0.25
        %v931 = vsel %vm579, %v930, -inf
        %932 = vmax.xlane.f32.xlu0 %v931
        %v933 = vpop.xlane.xlu0 %932
        %v934 = vsub.f32 %v930, %v933
        %v935 = vmul.f32 %v934, 1.442695
        %v936 = vpow.pop %v935
        %v937 = vsel %vm579, %v936, 0.0
        %938 = vadd.xlane.f32.xlu0 %v937
        %v939 = vpop.xlane.xlu0 %938
        %v940 = vrcp.pop %v939
        %v941 = vmul.f32 %v936, %v940
        %v942 = vpack.c.bf16 %v941, %v941
        %943 = vrot.lane.b32.xlu0 %v757, 48
        %v944 = vpop.permute.xlu0 %943
        %v946 = vsel %vm579, %v942, 0
        %v949 = vsel %vm764, %v944, 0
        %951 = vmatprep.subr.bf16.mxu0 0
        %952 = vmatpush1.bf16.msra.mxu0 %v949
        %953 = vmatprep.subr.bf16.mxu0 0
        %954 = vmatpush1.bf16.msra.mxu0 0
        %955 = vmatprep.subr.bf16.mxu0 0
        %956 = vmatpush1.bf16.msra.mxu0 0
        %957 = vmatprep.subr.bf16.mxu0 0
        %958 = vmatpush1.bf16.msra.mxu0 0
        %959 = vmatprep.subr.bf16.mxu0 0
        %960 = vmatpush1.bf16.msra.mxu0 0
        %961 = vmatprep.subr.bf16.mxu0 0
        %962 = vmatpush1.bf16.msra.mxu0 0
        %963 = vmatprep.subr.bf16.mxu0 0
        %964 = vmatpush1.bf16.msra.mxu0 0
        %965 = vmatprep.subr.bf16.mxu0 0
        %966 = vmatpush1.bf16.msra.mxu0 0
        %967 = vmatprep.subr.bf16.mxu0 0
        %968 = vmatpush1.bf16.msra.mxu0 0
        %969 = vmatprep.subr.bf16.mxu0 0
        %970 = vmatpush1.bf16.msra.mxu0 0
        %971 = vmatprep.subr.bf16.mxu0 0
        %972 = vmatpush1.bf16.msra.mxu0 0
        %973 = vmatprep.subr.bf16.mxu0 0
        %974 = vmatpush1.bf16.msra.mxu0 0
        %975 = vmatprep.subr.bf16.mxu0 0
        %976 = vmatpush1.bf16.msra.mxu0 0
        %977 = vmatprep.subr.bf16.mxu0 0
        %978 = vmatpush1.bf16.msra.mxu0 0
        %979 = vmatprep.subr.bf16.mxu0 0
        %980 = vmatpush1.bf16.msra.mxu0 0
        %981 = vmatprep.subr.bf16.mxu0 0
        %982 = vmatpush1.bf16.msra.mxu0 0
        %983 = vmatprep.mubr.bf16.mxu0 0
        %984 = vmatmul.mubr.bf16.gmra.mrb[0].mxu0 %v946
        %v985 = vpop.f32.mrb[0].mxu0
        %v986 = vadd.f32 0.0, %v985
        %v987 = vpop.f32.mrb[0].mxu0
        %v988 = vpop.f32.mrb[0].mxu0
        %v989 = vpop.f32.mrb[0].mxu0
        %990 = vdwg.mxu0
        %v991 = vpack.c.bf16 %v986, %v986
        %v992 = vld [vmem:[%s5 + $0x10] sm:$0xff]
        %v993 = vld [vmem:[%s5 + $0x18] sm:$0xff]
        %v994 = vpack.c.bf16 %v993, %v992
        %v996 = vsel %vm581, %v991, 0
        %998 = vmatprep.subr.bf16.mxu0 0
        %999 = vmatpush1.bf16.msra.mxu0 %v994
        %1000 = vmatprep.subr.bf16.mxu0 0
        %1001 = vmatpush1.bf16.msra.mxu0 0
        %1002 = vmatprep.subr.bf16.mxu0 0
        %1003 = vmatpush1.bf16.msra.mxu0 0
        %1004 = vmatprep.subr.bf16.mxu0 0
        %1005 = vmatpush1.bf16.msra.mxu0 0
        %1006 = vmatprep.subr.bf16.mxu0 0
        %1007 = vmatpush1.bf16.msra.mxu0 0
        %1008 = vmatprep.subr.bf16.mxu0 0
        %1009 = vmatpush1.bf16.msra.mxu0 0
        %1010 = vmatprep.subr.bf16.mxu0 0
        %1011 = vmatpush1.bf16.msra.mxu0 0
        %1012 = vmatprep.subr.bf16.mxu0 0
        %1013 = vmatpush1.bf16.msra.mxu0 0
        %1014 = vmatprep.subr.bf16.mxu0 0
        %1015 = vmatpush1.bf16.msra.mxu0 0
        %1016 = vmatprep.subr.bf16.mxu0 0
        %1017 = vmatpush1.bf16.msra.mxu0 0
        %1018 = vmatprep.subr.bf16.mxu0 0
        %1019 = vmatpush1.bf16.msra.mxu0 0
        %1020 = vmatprep.subr.bf16.mxu0 0
        %1021 = vmatpush1.bf16.msra.mxu0 0
        %1022 = vmatprep.subr.bf16.mxu0 0
        %1023 = vmatpush1.bf16.msra.mxu0 0
        %1024 = vmatprep.subr.bf16.mxu0 0
        %1025 = vmatpush1.bf16.msra.mxu0 0
        %1026 = vmatprep.subr.bf16.mxu0 0
        %1027 = vmatpush1.bf16.msra.mxu0 0
        %1028 = vmatprep.subr.bf16.mxu0 0
        %1029 = vmatpush1.bf16.msra.mxu0 0
        %1030 = vmatprep.mubr.bf16.mxu0 0
        %1031 = vmatmul.mubr.bf16.gmra.mrb[0].mxu0 %v996
        %v1032 = vpop.f32.mrb[0].mxu0
        %v1033 = vadd.f32 0.0, %v1032
        %v1034 = vpop.f32.mrb[0].mxu0
        %v1035 = vpop.f32.mrb[0].mxu0
        %v1036 = vpop.f32.mrb[0].mxu0
        %1037 = vdwg.mxu0
        %v1038 = vadd.f32 %v855, %v1033
        %1040 = vrot.lane.b32.xlu0 %v1038, 64
        %v1041 = vpop.permute.xlu0 %1040
        %v1043 = vmul.f32 %v394, %v1041
        %1045 = vrot.lane.b32.xlu0 %v1043, 64
        %v1046 = vpop.permute.xlu0 %1045
        %v1048 = vadd.f32 %v306, %v1046
        %1049 = vst.msk [vmem:[%s293] sm:$0xff] %vm323, %v1048
        %s1050 = sand.u32 %s191, 1
        %s1051 = scalar_lea.sflag [#allocation3], %s1050
        %s1052 = sand.u32 %s191, 1
        %s1053 = smul.addr %s1052, 8
        %s1054 = scalar_lea.vmem [#allocation2], %s1053
        // Predicated region
        $region49: #{single_stream_block.1} parent=47 // pred_check
          %p1055 = pneg %p201
        $region50: #{single_stream_block.1} parent=47 // pred_check_branch
          %1057 = sbr.rel (%p1055) target = $region52
        $region51: #{single_stream_block.1} parent=47 // pred_region
          %s1059 = ssub.s32 128, 128
          %1060 = vsyncadd %s1051, %s1059
          %s1061 = smul.addr %s21, 128
          %s1062 = scalar_lea.hbm %s7, %s1061
          %s1064 = sshll.u32 %s1054, 4
          %s1065 = int_to_ptr.vmem [resolvable:$true] %s1064
          %1067 = dma.vmem_to_hbm [thread:$0]  %s1065, 128, %s1062, %s1051
        $region52: #{single_stream_block.1} parent=47 // pred_fallthru
          _
      $region48: #{single_stream_block.1} parent=5 // pred_fallthru
        _
      %p1068 = scmp.le.s32.totalorder 2, %s16
      // Predicated region
      $region53: #{single_stream_block.1} parent=5 // pred_check
        %p1069 = pneg %p1068
      $region54: #{single_stream_block.1} parent=5 // pred_check_branch
        %1071 = sbr.rel (%p1069) target = $region56
      $region55: #{single_stream_block.1} parent=5 // pred_region
        %s1072 = ssub.s32 %s16, 2
        // Predicated region
        $region57: #{single_stream_block.1} parent=55 // pred_check
          %p1073 = pneg %p207
        $region58: #{single_stream_block.1} parent=55 // pred_check_branch
          %1075 = sbr.rel (%p1073) target = $region60
        $region59: #{single_stream_block.1} parent=55 // pred_region
          %s1076 = sand.u32 %s192, 1
          %s1077 = scalar_lea.sflag [#allocation3], %s1076
          %s1078 = sand.u32 %s192, 1
          %s1079 = smul.addr %s1078, 8
          %s1080 = scalar_lea.vmem [#allocation2], %s1079
          %1081 = dma.done %s1077, 128
        $region60: #{single_stream_block.1} parent=55 // pred_fallthru
          _
      $region56: #{single_stream_block.1} parent=5 // pred_fallthru
        _
    $region6: #{single_stream_block.1} parent=1 // loop_footer
      %s20 = sadd.s32 1, %s16
    $region7: #{single_stream_block.1} parent=1 // loop_footer_branch
      %15 = sbr.rel target = $region3
    $region8: #{single_stream_block.1} parent=1 // loop_exit
      _
    %1082 = vsyncpa [#allocation3], 1
    %s1083 = scalar_lea.sflag [#allocation3], 1
    %1084 = vsyncpa %s1083, 1

</llo_original>
